<compile_context>
chip_gen: v5e
topology: v5e:2x2
jax: 0.10.0
libtpu: 0.0.40
codegen_flags: <defaults>
</compile_context>

<pallas_src>
import functools

import jax
import jax.numpy as jnp
import numpy as np
from jax.experimental import pallas as pl
from jax.experimental.pallas import tpu as pltpu

_N_CH = 16  # conv1 output channels (1x1 conv, single input channel)


def _round_up(x, m):
    return (x + m - 1) // m * m


def _choose_batch_tile(b, hw):
    """Batch-tile (lane) width: multiple of 128, VMEM-budgeted, >=2 tiles when big."""
    budget = 20 * 1024 * 1024                         # target scoped-VMEM use
    resident = _N_CH * hw * 32 * 4                    # fc1_w block (f32)
    per_col = (_N_CH * hw + 2 * hw + 2) * 4           # slab + double-buffered x^T + out
    vmem_cap = max(128, (budget - resident) // per_col // 128 * 128)
    # Split the batch across >= 2 tiles once it is large enough (v7x has 2 TCs);
    # below that the per-tile work is launch-overhead dominated anyway.
    want = _round_up(-(-b // 2), 128) if b > 128 else 128
    return min(1024, vmem_cap, want)


def _cnn_kernel(cw_ref, cb_ref, b2_ref, xt_ref, w1_ref, b1_ref, w2_ref,
                o_ref, slab_ref):
    """One batch-tile grid step.

    cw_ref  : (16,)         SMEM  conv1 weight (1x1 conv, 1 input channel)
    cb_ref  : (16,)         SMEM  conv1 bias
    b2_ref  : (1,)          SMEM  fc2 bias
    xt_ref  : (HW, TB)      VMEM  f32 x^T batch tile
    w1_ref  : (32, 16*HW)   VMEM  f32 fc1 weight (resident, PyTorch layout as-is)
    b1_ref  : (32, 1)       VMEM  f32 fc1 bias column
    w2_ref  : (32, 1)       VMEM  f32 fc2 weight column
    o_ref   : (1, TB)       VMEM  f32 output row (lane dense)
    slab_ref: (16*HW, TB)   VMEM  f32 scratch: stacked conv activations
    """
    hw = xt_ref.shape[0]
    n_ch = cw_ref.shape[0]
    xt = xt_ref[...]                                             # (HW, TB) f32

    # 1x1 conv (+ReLU) per output channel == per-pixel affine with SMEM scalars.
    # Stack the channels along sublanes -> (16*HW, TB) slab; the row order
    # (channel-major, then pixel) matches PyTorch's flatten order exactly.
    for c in range(n_ch):
        slab_ref[c * hw:(c + 1) * hw, :] = jnp.maximum(
            xt * cw_ref[c] + cb_ref[c], 0.0)

    # fc1: a single MXU matmul with full K (=16*HW) and full N (=TB), f32 accumulate.
    h1 = jnp.dot(w1_ref[...], slab_ref[...],
                 preferred_element_type=jnp.float32)             # (32, TB)
    h1 = jnp.maximum(h1 + b1_ref[...], 0.0)

    # fc2 (N=1, K=32): VPU multiply + sublane reduce; lane-dense (1, TB) store.
    out = jnp.sum(h1 * w2_ref[...], axis=0, keepdims=True) + b2_ref[0]
    o_ref[...] = out.astype(o_ref.dtype)


def prepare_params(params, height, width):
    """One-time repack of the PyTorch-layout params into kernel layout (all f32).

    PyTorch flattens the conv output channel-major (c, h, w), which is exactly the
    row order of the in-kernel activation slab, so fc1_w is used as-is (no transpose).
    """
    hw = height * width
    return {
        "conv_w": params["conv_w"].reshape(_N_CH).astype(jnp.float32),
        "conv_b": params["conv_b"].reshape(_N_CH).astype(jnp.float32),
        "fc1_w": params["fc1_w"].reshape(32, _N_CH * hw).astype(jnp.float32),
        "fc1_b": params["fc1_b"].reshape(32, 1).astype(jnp.float32),
        "fc2_w": params["fc2_w"].reshape(32, 1).astype(jnp.float32),
        "fc2_b": params["fc2_b"].reshape(1).astype(jnp.float32),
    }


@functools.partial(jax.jit, static_argnames=("height", "width"))
def cnn_model_forward(x_nchw, kparams, *, height, width):
    """x_nchw: (B, 1, H, W) float32. kparams from prepare_params(). Returns (B, 1) f32."""
    b = x_nchw.shape[0]
    hw = height * width

    tb = _choose_batch_tile(b, hw)
    b_pad = _round_up(b, tb)
    num_tiles = b_pad // tb

    # Single cheap layout pass (fused reshape/transpose/pad), no dtype quantization.
    xt = x_nchw.reshape(b, hw).T                                  # (HW, B) f32
    if b_pad != b:
        xt = jnp.pad(xt, ((0, 0), (0, b_pad - b)))

    smem = pl.BlockSpec(memory_space=pltpu.MemorySpace.SMEM)
    grid_spec = pltpu.PrefetchScalarGridSpec(
        num_scalar_prefetch=0,
        grid=(num_tiles,),
        in_specs=[
            smem,                                                 # conv_w (16,)
            smem,                                                 # conv_b (16,)
            smem,                                                 # fc2_b  (1,)
            pl.BlockSpec((hw, tb), lambda i: (0, i)),             # x^T batch tile
            pl.BlockSpec((32, _N_CH * hw), lambda i: (0, 0)),     # fc1_w, resident
            pl.BlockSpec((32, 1), lambda i: (0, 0)),              # fc1 bias column
            pl.BlockSpec((32, 1), lambda i: (0, 0)),              # fc2 weight column
        ],
        out_specs=pl.BlockSpec((1, tb), lambda i: (0, i)),
        scratch_shapes=[pltpu.VMEM((_N_CH * hw, tb), jnp.float32)],
    )

    out = pl.pallas_call(
        _cnn_kernel,
        out_shape=jax.ShapeDtypeStruct((1, b_pad), jnp.float32),
        grid_spec=grid_spec,
        compiler_params=pltpu.CompilerParams(
            dimension_semantics=("parallel",),
            vmem_limit_bytes=32 * 1024 * 1024),
    )(kparams["conv_w"], kparams["conv_b"], kparams["fc2_b"],
      xt, kparams["fc1_w"], kparams["fc1_b"], kparams["fc2_w"])

    return out[0, :b][:, None]


def init_params(key, height, width):
    """Deterministic synthetic parameters with the shapes nn.Module.__init__ implies."""
    k = jax.random.split(key, 6)
    feat = _N_CH * height * width
    return {
        "conv_w": jax.random.normal(k[0], (_N_CH, 1, 1, 1), jnp.float32) * 0.5,
        "conv_b": jax.random.normal(k[1], (_N_CH,), jnp.float32) * 0.1,
        "fc1_w": jax.random.normal(k[2], (32, feat), jnp.float32) * (1.0 / np.sqrt(feat)),
        "fc1_b": jax.random.normal(k[3], (32,), jnp.float32) * 0.1,
        "fc2_w": jax.random.normal(k[4], (1, 32), jnp.float32) * (1.0 / np.sqrt(32)),
        "fc2_b": jax.random.normal(k[5], (1,), jnp.float32) * 0.1,
    }


def reference_forward(x_nchw, params, height, width):
    """Pure-JAX f32 reference reproducing the PyTorch forward exactly."""
    b = x_nchw.shape[0]
    conv = (x_nchw[:, 0, :, :][:, None, :, :] *
            params["conv_w"].reshape(1, _N_CH, 1, 1) +
            params["conv_b"].reshape(1, _N_CH, 1, 1))
    conv = jnp.maximum(conv, 0.0)                                 # (B, 16, H, W)
    flat = conv.reshape(b, _N_CH * height * width)
    h1 = jnp.maximum(flat @ params["fc1_w"].T + params["fc1_b"], 0.0)
    return h1 @ params["fc2_w"].T + params["fc2_b"]


if __name__ == "__main__":
    H, W = 8, 8
    key = jax.random.PRNGKey(0)
    kx, kp = jax.random.split(key)

    params = init_params(kp, H, W)
    kparams = prepare_params(params, H, W)   # one-time repack, outside the jitted forward

    # Small-batch check (single tile).
    x_small = jax.random.normal(kx, (2, 1, H, W), jnp.float32)
    out_small = jax.block_until_ready(cnn_model_forward(x_small, kparams, height=H, width=W))
    ref_small = reference_forward(x_small, params, H, W)
    np.testing.assert_allclose(np.asarray(out_small), np.asarray(ref_small),
                               rtol=1e-2, atol=1e-2)

    # Multi-tile / padded-batch check (exercises grid > 1 and batch padding).
    x_big = jax.random.normal(jax.random.PRNGKey(1), (130, 1, H, W), jnp.float32)
    out_big = jax.block_until_ready(cnn_model_forward(x_big, kparams, height=H, width=W))
    ref_big = reference_forward(x_big, params, H, W)
    np.testing.assert_allclose(np.asarray(out_big), np.asarray(ref_big),
                               rtol=1e-2, atol=1e-2)

    print("KERNEL_OK")
</pallas_src>

<mosaic_0001>
module attributes {stable_mosaic.version = 11 : i64} {
  func.func @_cnn_kernel(%arg0: i32, %arg1: memref<16xf32, #tpu.memory_space<smem>>, %arg2: memref<16xf32, #tpu.memory_space<smem>>, %arg3: memref<1xf32, #tpu.memory_space<smem>>, %arg4: memref<64x128xf32, #tpu.memory_space<vmem>>, %arg5: memref<32x1024xf32, #tpu.memory_space<vmem>>, %arg6: memref<32x1xf32, #tpu.memory_space<vmem>>, %arg7: memref<32x1xf32, #tpu.memory_space<vmem>>, %arg8: memref<1x128xf32, #tpu.memory_space<vmem>>, %arg9: memref<1024x128xf32, #tpu.memory_space<vmem>>) attributes {dimension_semantics = [#tpu.dimension_semantics<parallel>], iteration_bounds = array<i64: 1>, scalar_prefetch = 0 : i64, scratch_operands = 1 : i64, tpu.core_type = #tpu.core_type<tc>, window_params = [{transform_indices = @transform_0, window_bounds = array<i64: 16>}, {transform_indices = @transform_1, window_bounds = array<i64: 16>}, {transform_indices = @transform_2, window_bounds = array<i64: 1>}, {transform_indices = @transform_3, window_bounds = array<i64: 64, 128>}, {pipeline_mode = #tpu.pipeline_mode<synchronous>, transform_indices = @transform_4, window_bounds = array<i64: 32, 1024>}, {pipeline_mode = #tpu.pipeline_mode<synchronous>, transform_indices = @transform_5, window_bounds = array<i64: 32, 1>}, {pipeline_mode = #tpu.pipeline_mode<synchronous>, transform_indices = @transform_6, window_bounds = array<i64: 32, 1>}, {transform_indices = @transform_7, window_bounds = array<i64: 1, 128>}]} {
    %c0 = arith.constant 0 : index
    %c0_0 = arith.constant 0 : index
    %0 = vector.load %arg4[%c0, %c0_0] : memref<64x128xf32, #tpu.memory_space<vmem>>, vector<64x128xf32>
    %c0_1 = arith.constant 0 : index
    %1 = memref.load %arg1[%c0_1] : memref<16xf32, #tpu.memory_space<smem>>
    %2 = vector.broadcast %1 : f32 to vector<64x128xf32>
    %3 = arith.mulf %0, %2 : vector<64x128xf32>
    %c0_2 = arith.constant 0 : index
    %4 = memref.load %arg2[%c0_2] : memref<16xf32, #tpu.memory_space<smem>>
    %5 = vector.broadcast %4 : f32 to vector<64x128xf32>
    %6 = arith.addf %3, %5 : vector<64x128xf32>
    %cst = arith.constant 0.000000e+00 : f32
    %7 = vector.broadcast %cst : f32 to vector<64x128xf32>
    %8 = arith.maximumf %6, %7 : vector<64x128xf32>
    %c0_3 = arith.constant 0 : index
    %c0_4 = arith.constant 0 : index
    %9 = vector.load %arg9[%c0_3, %c0_4] : memref<1024x128xf32, #tpu.memory_space<vmem>>, vector<64x128xf32>
    tpu.vector_store %arg9[%c0_3, %c0_4], %8 {strides = array<i32>} : memref<1024x128xf32, #tpu.memory_space<vmem>>, vector<64x128xf32>,
    %c1 = arith.constant 1 : index
    %10 = memref.load %arg1[%c1] : memref<16xf32, #tpu.memory_space<smem>>
    %11 = vector.broadcast %10 : f32 to vector<64x128xf32>
    %12 = arith.mulf %0, %11 : vector<64x128xf32>
    %c1_5 = arith.constant 1 : index
    %13 = memref.load %arg2[%c1_5] : memref<16xf32, #tpu.memory_space<smem>>
    %14 = vector.broadcast %13 : f32 to vector<64x128xf32>
    %15 = arith.addf %12, %14 : vector<64x128xf32>
    %cst_6 = arith.constant 0.000000e+00 : f32
    %16 = vector.broadcast %cst_6 : f32 to vector<64x128xf32>
    %17 = arith.maximumf %15, %16 : vector<64x128xf32>
    %c64 = arith.constant 64 : index
    %c0_7 = arith.constant 0 : index
    %18 = vector.load %arg9[%c64, %c0_7] : memref<1024x128xf32, #tpu.memory_space<vmem>>, vector<64x128xf32>
    tpu.vector_store %arg9[%c64, %c0_7], %17 {strides = array<i32>} : memref<1024x128xf32, #tpu.memory_space<vmem>>, vector<64x128xf32>,
    %c2 = arith.constant 2 : index
    %19 = memref.load %arg1[%c2] : memref<16xf32, #tpu.memory_space<smem>>
    %20 = vector.broadcast %19 : f32 to vector<64x128xf32>
    %21 = arith.mulf %0, %20 : vector<64x128xf32>
    %c2_8 = arith.constant 2 : index
    %22 = memref.load %arg2[%c2_8] : memref<16xf32, #tpu.memory_space<smem>>
    %23 = vector.broadcast %22 : f32 to vector<64x128xf32>
    %24 = arith.addf %21, %23 : vector<64x128xf32>
    %cst_9 = arith.constant 0.000000e+00 : f32
    %25 = vector.broadcast %cst_9 : f32 to vector<64x128xf32>
    %26 = arith.maximumf %24, %25 : vector<64x128xf32>
    %c128 = arith.constant 128 : index
    %c0_10 = arith.constant 0 : index
    %27 = vector.load %arg9[%c128, %c0_10] : memref<1024x128xf32, #tpu.memory_space<vmem>>, vector<64x128xf32>
    tpu.vector_store %arg9[%c128, %c0_10], %26 {strides = array<i32>} : memref<1024x128xf32, #tpu.memory_space<vmem>>, vector<64x128xf32>,
    %c3 = arith.constant 3 : index
    %28 = memref.load %arg1[%c3] : memref<16xf32, #tpu.memory_space<smem>>
    %29 = vector.broadcast %28 : f32 to vector<64x128xf32>
    %30 = arith.mulf %0, %29 : vector<64x128xf32>
    %c3_11 = arith.constant 3 : index
    %31 = memref.load %arg2[%c3_11] : memref<16xf32, #tpu.memory_space<smem>>
    %32 = vector.broadcast %31 : f32 to vector<64x128xf32>
    %33 = arith.addf %30, %32 : vector<64x128xf32>
    %cst_12 = arith.constant 0.000000e+00 : f32
    %34 = vector.broadcast %cst_12 : f32 to vector<64x128xf32>
    %35 = arith.maximumf %33, %34 : vector<64x128xf32>
    %c192 = arith.constant 192 : index
    %c0_13 = arith.constant 0 : index
    %36 = vector.load %arg9[%c192, %c0_13] : memref<1024x128xf32, #tpu.memory_space<vmem>>, vector<64x128xf32>
    tpu.vector_store %arg9[%c192, %c0_13], %35 {strides = array<i32>} : memref<1024x128xf32, #tpu.memory_space<vmem>>, vector<64x128xf32>,
    %c4 = arith.constant 4 : index
    %37 = memref.load %arg1[%c4] : memref<16xf32, #tpu.memory_space<smem>>
    %38 = vector.broadcast %37 : f32 to vector<64x128xf32>
    %39 = arith.mulf %0, %38 : vector<64x128xf32>
    %c4_14 = arith.constant 4 : index
    %40 = memref.load %arg2[%c4_14] : memref<16xf32, #tpu.memory_space<smem>>
    %41 = vector.broadcast %40 : f32 to vector<64x128xf32>
    %42 = arith.addf %39, %41 : vector<64x128xf32>
    %cst_15 = arith.constant 0.000000e+00 : f32
    %43 = vector.broadcast %cst_15 : f32 to vector<64x128xf32>
    %44 = arith.maximumf %42, %43 : vector<64x128xf32>
    %c256 = arith.constant 256 : index
    %c0_16 = arith.constant 0 : index
    %45 = vector.load %arg9[%c256, %c0_16] : memref<1024x128xf32, #tpu.memory_space<vmem>>, vector<64x128xf32>
    tpu.vector_store %arg9[%c256, %c0_16], %44 {strides = array<i32>} : memref<1024x128xf32, #tpu.memory_space<vmem>>, vector<64x128xf32>,
    %c5 = arith.constant 5 : index
    %46 = memref.load %arg1[%c5] : memref<16xf32, #tpu.memory_space<smem>>
    %47 = vector.broadcast %46 : f32 to vector<64x128xf32>
    %48 = arith.mulf %0, %47 : vector<64x128xf32>
    %c5_17 = arith.constant 5 : index
    %49 = memref.load %arg2[%c5_17] : memref<16xf32, #tpu.memory_space<smem>>
    %50 = vector.broadcast %49 : f32 to vector<64x128xf32>
    %51 = arith.addf %48, %50 : vector<64x128xf32>
    %cst_18 = arith.constant 0.000000e+00 : f32
    %52 = vector.broadcast %cst_18 : f32 to vector<64x128xf32>
    %53 = arith.maximumf %51, %52 : vector<64x128xf32>
    %c320 = arith.constant 320 : index
    %c0_19 = arith.constant 0 : index
    %54 = vector.load %arg9[%c320, %c0_19] : memref<1024x128xf32, #tpu.memory_space<vmem>>, vector<64x128xf32>
    tpu.vector_store %arg9[%c320, %c0_19], %53 {strides = array<i32>} : memref<1024x128xf32, #tpu.memory_space<vmem>>, vector<64x128xf32>,
    %c6 = arith.constant 6 : index
    %55 = memref.load %arg1[%c6] : memref<16xf32, #tpu.memory_space<smem>>
    %56 = vector.broadcast %55 : f32 to vector<64x128xf32>
    %57 = arith.mulf %0, %56 : vector<64x128xf32>
    %c6_20 = arith.constant 6 : index
    %58 = memref.load %arg2[%c6_20] : memref<16xf32, #tpu.memory_space<smem>>
    %59 = vector.broadcast %58 : f32 to vector<64x128xf32>
    %60 = arith.addf %57, %59 : vector<64x128xf32>
    %cst_21 = arith.constant 0.000000e+00 : f32
    %61 = vector.broadcast %cst_21 : f32 to vector<64x128xf32>
    %62 = arith.maximumf %60, %61 : vector<64x128xf32>
    %c384 = arith.constant 384 : index
    %c0_22 = arith.constant 0 : index
    %63 = vector.load %arg9[%c384, %c0_22] : memref<1024x128xf32, #tpu.memory_space<vmem>>, vector<64x128xf32>
    tpu.vector_store %arg9[%c384, %c0_22], %62 {strides = array<i32>} : memref<1024x128xf32, #tpu.memory_space<vmem>>, vector<64x128xf32>,
    %c7 = arith.constant 7 : index
    %64 = memref.load %arg1[%c7] : memref<16xf32, #tpu.memory_space<smem>>
    %65 = vector.broadcast %64 : f32 to vector<64x128xf32>
    %66 = arith.mulf %0, %65 : vector<64x128xf32>
    %c7_23 = arith.constant 7 : index
    %67 = memref.load %arg2[%c7_23] : memref<16xf32, #tpu.memory_space<smem>>
    %68 = vector.broadcast %67 : f32 to vector<64x128xf32>
    %69 = arith.addf %66, %68 : vector<64x128xf32>
    %cst_24 = arith.constant 0.000000e+00 : f32
    %70 = vector.broadcast %cst_24 : f32 to vector<64x128xf32>
    %71 = arith.maximumf %69, %70 : vector<64x128xf32>
    %c448 = arith.constant 448 : index
    %c0_25 = arith.constant 0 : index
    %72 = vector.load %arg9[%c448, %c0_25] : memref<1024x128xf32, #tpu.memory_space<vmem>>, vector<64x128xf32>
    tpu.vector_store %arg9[%c448, %c0_25], %71 {strides = array<i32>} : memref<1024x128xf32, #tpu.memory_space<vmem>>, vector<64x128xf32>,
    %c8 = arith.constant 8 : index
    %73 = memref.load %arg1[%c8] : memref<16xf32, #tpu.memory_space<smem>>
    %74 = vector.broadcast %73 : f32 to vector<64x128xf32>
    %75 = arith.mulf %0, %74 : vector<64x128xf32>
    %c8_26 = arith.constant 8 : index
    %76 = memref.load %arg2[%c8_26] : memref<16xf32, #tpu.memory_space<smem>>
    %77 = vector.broadcast %76 : f32 to vector<64x128xf32>
    %78 = arith.addf %75, %77 : vector<64x128xf32>
    %cst_27 = arith.constant 0.000000e+00 : f32
    %79 = vector.broadcast %cst_27 : f32 to vector<64x128xf32>
    %80 = arith.maximumf %78, %79 : vector<64x128xf32>
    %c512 = arith.constant 512 : index
    %c0_28 = arith.constant 0 : index
    %81 = vector.load %arg9[%c512, %c0_28] : memref<1024x128xf32, #tpu.memory_space<vmem>>, vector<64x128xf32>
    tpu.vector_store %arg9[%c512, %c0_28], %80 {strides = array<i32>} : memref<1024x128xf32, #tpu.memory_space<vmem>>, vector<64x128xf32>,
    %c9 = arith.constant 9 : index
    %82 = memref.load %arg1[%c9] : memref<16xf32, #tpu.memory_space<smem>>
    %83 = vector.broadcast %82 : f32 to vector<64x128xf32>
    %84 = arith.mulf %0, %83 : vector<64x128xf32>
    %c9_29 = arith.constant 9 : index
    %85 = memref.load %arg2[%c9_29] : memref<16xf32, #tpu.memory_space<smem>>
    %86 = vector.broadcast %85 : f32 to vector<64x128xf32>
    %87 = arith.addf %84, %86 : vector<64x128xf32>
    %cst_30 = arith.constant 0.000000e+00 : f32
    %88 = vector.broadcast %cst_30 : f32 to vector<64x128xf32>
    %89 = arith.maximumf %87, %88 : vector<64x128xf32>
    %c576 = arith.constant 576 : index
    %c0_31 = arith.constant 0 : index
    %90 = vector.load %arg9[%c576, %c0_31] : memref<1024x128xf32, #tpu.memory_space<vmem>>, vector<64x128xf32>
    tpu.vector_store %arg9[%c576, %c0_31], %89 {strides = array<i32>} : memref<1024x128xf32, #tpu.memory_space<vmem>>, vector<64x128xf32>,
    %c10 = arith.constant 10 : index
    %91 = memref.load %arg1[%c10] : memref<16xf32, #tpu.memory_space<smem>>
    %92 = vector.broadcast %91 : f32 to vector<64x128xf32>
    %93 = arith.mulf %0, %92 : vector<64x128xf32>
    %c10_32 = arith.constant 10 : index
    %94 = memref.load %arg2[%c10_32] : memref<16xf32, #tpu.memory_space<smem>>
    %95 = vector.broadcast %94 : f32 to vector<64x128xf32>
    %96 = arith.addf %93, %95 : vector<64x128xf32>
    %cst_33 = arith.constant 0.000000e+00 : f32
    %97 = vector.broadcast %cst_33 : f32 to vector<64x128xf32>
    %98 = arith.maximumf %96, %97 : vector<64x128xf32>
    %c640 = arith.constant 640 : index
    %c0_34 = arith.constant 0 : index
    %99 = vector.load %arg9[%c640, %c0_34] : memref<1024x128xf32, #tpu.memory_space<vmem>>, vector<64x128xf32>
    tpu.vector_store %arg9[%c640, %c0_34], %98 {strides = array<i32>} : memref<1024x128xf32, #tpu.memory_space<vmem>>, vector<64x128xf32>,
    %c11 = arith.constant 11 : index
    %100 = memref.load %arg1[%c11] : memref<16xf32, #tpu.memory_space<smem>>
    %101 = vector.broadcast %100 : f32 to vector<64x128xf32>
    %102 = arith.mulf %0, %101 : vector<64x128xf32>
    %c11_35 = arith.constant 11 : index
    %103 = memref.load %arg2[%c11_35] : memref<16xf32, #tpu.memory_space<smem>>
    %104 = vector.broadcast %103 : f32 to vector<64x128xf32>
    %105 = arith.addf %102, %104 : vector<64x128xf32>
    %cst_36 = arith.constant 0.000000e+00 : f32
    %106 = vector.broadcast %cst_36 : f32 to vector<64x128xf32>
    %107 = arith.maximumf %105, %106 : vector<64x128xf32>
    %c704 = arith.constant 704 : index
    %c0_37 = arith.constant 0 : index
    %108 = vector.load %arg9[%c704, %c0_37] : memref<1024x128xf32, #tpu.memory_space<vmem>>, vector<64x128xf32>
    tpu.vector_store %arg9[%c704, %c0_37], %107 {strides = array<i32>} : memref<1024x128xf32, #tpu.memory_space<vmem>>, vector<64x128xf32>,
    %c12 = arith.constant 12 : index
    %109 = memref.load %arg1[%c12] : memref<16xf32, #tpu.memory_space<smem>>
    %110 = vector.broadcast %109 : f32 to vector<64x128xf32>
    %111 = arith.mulf %0, %110 : vector<64x128xf32>
    %c12_38 = arith.constant 12 : index
    %112 = memref.load %arg2[%c12_38] : memref<16xf32, #tpu.memory_space<smem>>
    %113 = vector.broadcast %112 : f32 to vector<64x128xf32>
    %114 = arith.addf %111, %113 : vector<64x128xf32>
    %cst_39 = arith.constant 0.000000e+00 : f32
    %115 = vector.broadcast %cst_39 : f32 to vector<64x128xf32>
    %116 = arith.maximumf %114, %115 : vector<64x128xf32>
    %c768 = arith.constant 768 : index
    %c0_40 = arith.constant 0 : index
    %117 = vector.load %arg9[%c768, %c0_40] : memref<1024x128xf32, #tpu.memory_space<vmem>>, vector<64x128xf32>
    tpu.vector_store %arg9[%c768, %c0_40], %116 {strides = array<i32>} : memref<1024x128xf32, #tpu.memory_space<vmem>>, vector<64x128xf32>,
    %c13 = arith.constant 13 : index
    %118 = memref.load %arg1[%c13] : memref<16xf32, #tpu.memory_space<smem>>
    %119 = vector.broadcast %118 : f32 to vector<64x128xf32>
    %120 = arith.mulf %0, %119 : vector<64x128xf32>
    %c13_41 = arith.constant 13 : index
    %121 = memref.load %arg2[%c13_41] : memref<16xf32, #tpu.memory_space<smem>>
    %122 = vector.broadcast %121 : f32 to vector<64x128xf32>
    %123 = arith.addf %120, %122 : vector<64x128xf32>
    %cst_42 = arith.constant 0.000000e+00 : f32
    %124 = vector.broadcast %cst_42 : f32 to vector<64x128xf32>
    %125 = arith.maximumf %123, %124 : vector<64x128xf32>
    %c832 = arith.constant 832 : index
    %c0_43 = arith.constant 0 : index
    %126 = vector.load %arg9[%c832, %c0_43] : memref<1024x128xf32, #tpu.memory_space<vmem>>, vector<64x128xf32>
    tpu.vector_store %arg9[%c832, %c0_43], %125 {strides = array<i32>} : memref<1024x128xf32, #tpu.memory_space<vmem>>, vector<64x128xf32>,
    %c14 = arith.constant 14 : index
    %127 = memref.load %arg1[%c14] : memref<16xf32, #tpu.memory_space<smem>>
    %128 = vector.broadcast %127 : f32 to vector<64x128xf32>
    %129 = arith.mulf %0, %128 : vector<64x128xf32>
    %c14_44 = arith.constant 14 : index
    %130 = memref.load %arg2[%c14_44] : memref<16xf32, #tpu.memory_space<smem>>
    %131 = vector.broadcast %130 : f32 to vector<64x128xf32>
    %132 = arith.addf %129, %131 : vector<64x128xf32>
    %cst_45 = arith.constant 0.000000e+00 : f32
    %133 = vector.broadcast %cst_45 : f32 to vector<64x128xf32>
    %134 = arith.maximumf %132, %133 : vector<64x128xf32>
    %c896 = arith.constant 896 : index
    %c0_46 = arith.constant 0 : index
    %135 = vector.load %arg9[%c896, %c0_46] : memref<1024x128xf32, #tpu.memory_space<vmem>>, vector<64x128xf32>
    tpu.vector_store %arg9[%c896, %c0_46], %134 {strides = array<i32>} : memref<1024x128xf32, #tpu.memory_space<vmem>>, vector<64x128xf32>,
    %c15 = arith.constant 15 : index
    %136 = memref.load %arg1[%c15] : memref<16xf32, #tpu.memory_space<smem>>
    %137 = vector.broadcast %136 : f32 to vector<64x128xf32>
    %138 = arith.mulf %0, %137 : vector<64x128xf32>
    %c15_47 = arith.constant 15 : index
    %139 = memref.load %arg2[%c15_47] : memref<16xf32, #tpu.memory_space<smem>>
    %140 = vector.broadcast %139 : f32 to vector<64x128xf32>
    %141 = arith.addf %138, %140 : vector<64x128xf32>
    %cst_48 = arith.constant 0.000000e+00 : f32
    %142 = vector.broadcast %cst_48 : f32 to vector<64x128xf32>
    %143 = arith.maximumf %141, %142 : vector<64x128xf32>
    %c960 = arith.constant 960 : index
    %c0_49 = arith.constant 0 : index
    %144 = vector.load %arg9[%c960, %c0_49] : memref<1024x128xf32, #tpu.memory_space<vmem>>, vector<64x128xf32>
    tpu.vector_store %arg9[%c960, %c0_49], %143 {strides = array<i32>} : memref<1024x128xf32, #tpu.memory_space<vmem>>, vector<64x128xf32>,
    %c0_50 = arith.constant 0 : index
    %c0_51 = arith.constant 0 : index
    %145 = vector.load %arg5[%c0_50, %c0_51] : memref<32x1024xf32, #tpu.memory_space<vmem>>, vector<32x1024xf32>
    %c0_52 = arith.constant 0 : index
    %c0_53 = arith.constant 0 : index
    %146 = vector.load %arg9[%c0_52, %c0_53] : memref<1024x128xf32, #tpu.memory_space<vmem>>, vector<1024x128xf32>
    %cst_54 = arith.constant dense<0.000000e+00> : vector<32x128xf32>
    %147 = tpu.matmul %145, %146, %cst_54 {dimension_numbers = #tpu.dot_dimension_numbers<[1], [0], [0], [1], [0, 0, 1, 1], [], []>} : vector<32x1024xf32>, vector<1024x128xf32>, vector<32x128xf32> -> vector<32x128xf32>
    %c0_55 = arith.constant 0 : index
    %c0_56 = arith.constant 0 : index
    %148 = vector.load %arg6[%c0_55, %c0_56] : memref<32x1xf32, #tpu.memory_space<vmem>>, vector<32x1xf32>
    %149 = vector.broadcast %148 : vector<32x1xf32> to vector<32x128xf32>
    %150 = arith.addf %147, %149 : vector<32x128xf32>
    %cst_57 = arith.constant 0.000000e+00 : f32
    %151 = vector.broadcast %cst_57 : f32 to vector<32x128xf32>
    %152 = arith.maximumf %150, %151 : vector<32x128xf32>
    %c0_58 = arith.constant 0 : index
    %c0_59 = arith.constant 0 : index
    %153 = vector.load %arg7[%c0_58, %c0_59] : memref<32x1xf32, #tpu.memory_space<vmem>>, vector<32x1xf32>
    %154 = vector.broadcast %153 : vector<32x1xf32> to vector<32x128xf32>
    %155 = arith.mulf %152, %154 : vector<32x128xf32>
    %cst_60 = arith.constant dense<0.000000e+00> : vector<128xf32>
    %156 = vector.multi_reduction <add>, %155, %cst_60 [0] : vector<32x128xf32> to vector<128xf32>
    %157 = vector.shape_cast %156 : vector<128xf32> to vector<1x128xf32>
    %c0_61 = arith.constant 0 : index
    %158 = memref.load %arg3[%c0_61] : memref<1xf32, #tpu.memory_space<smem>>
    %159 = vector.broadcast %158 : f32 to vector<1x128xf32>
    %160 = arith.addf %157, %159 : vector<1x128xf32>
    %c0_62 = arith.constant 0 : index
    %c0_63 = arith.constant 0 : index
    %161 = vector.load %arg8[%c0_62, %c0_63] : memref<1x128xf32, #tpu.memory_space<vmem>>, vector<1x128xf32>
    tpu.vector_store %arg8[%c0_62, %c0_63], %160 {strides = array<i32>} : memref<1x128xf32, #tpu.memory_space<vmem>>, vector<1x128xf32>,
    return
  }
  func.func @transform_0(%arg0: i32) -> i32 {
    %c0_i32 = arith.constant 0 : i32
    %c0_i32_0 = arith.constant 0 : i32
    return %c0_i32 : i32
  }
  func.func @transform_1(%arg0: i32) -> i32 {
    %c0_i32 = arith.constant 0 : i32
    %c0_i32_0 = arith.constant 0 : i32
    return %c0_i32 : i32
  }
  func.func @transform_2(%arg0: i32) -> i32 {
    %c0_i32 = arith.constant 0 : i32
    %c0_i32_0 = arith.constant 0 : i32
    return %c0_i32 : i32
  }
  func.func @transform_3(%arg0: i32) -> (i32, i32) {
    %c0_i32 = arith.constant 0 : i32
    %c0_i32_0 = arith.constant 0 : i32
    return %c0_i32, %arg0 : i32, i32
  }
  func.func @transform_4(%arg0: i32) -> (i32, i32) {
    %c0_i32 = arith.constant 0 : i32
    %c0_i32_0 = arith.constant 0 : i32
    %c0_i32_1 = arith.constant 0 : i32
    return %c0_i32, %c0_i32_0 : i32, i32
  }
  func.func @transform_5(%arg0: i32) -> (i32, i32) {
    %c0_i32 = arith.constant 0 : i32
    %c0_i32_0 = arith.constant 0 : i32
    %c0_i32_1 = arith.constant 0 : i32
    return %c0_i32, %c0_i32_0 : i32, i32
  }
  func.func @transform_6(%arg0: i32) -> (i32, i32) {
    %c0_i32 = arith.constant 0 : i32
    %c0_i32_0 = arith.constant 0 : i32
    %c0_i32_1 = arith.constant 0 : i32
    return %c0_i32, %c0_i32_0 : i32, i32
  }
  func.func @transform_7(%arg0: i32) -> (i32, i32) {
    %c0_i32 = arith.constant 0 : i32
    %c0_i32_0 = arith.constant 0 : i32
    return %c0_i32, %arg0 : i32, i32
  }
}

</mosaic_0001>

<llo_original>
// kernel: cnn_model_forward.1
$region0: #{cnn_model_forward.1}
  #allocation0 [shape = 'u32[]', space=smem, size = 0x4, offset = 0x4, fixed_abs, tag = 'smem constant byte address 0x4 - core index']
  #allocation1 [shape = 'u32[72,128]{1,0:T(1,128)}', space=vmem, size = 0x9000, scoped, tag = 'internal scratch']
  #allocation2 [shape = 'f32[1024,128]{1,0:T(8,128)}', space=vmem, size = 0x80000, scoped, tag = 'scratch operand']
  #allocation3 [shape = 'f32[1]{0:T(128)S(6)}', space=smem, size = 0x200, scoped, tag = 'scoped memory for cnn_model_forward.1']
  %s0 = inlined_call_operand.vmem [shape: f32[16], index: 0, kind: input, shape index: {}]
  %s1 = inlined_call_operand.vmem [shape: f32[16], index: 1, kind: input, shape index: {}]
  %s2 = inlined_call_operand.<no memory space> [shape: f32[1], index: 2, kind: input, shape index: {}]
  %s3 = inlined_call_operand.vmem [shape: f32[64,128], index: 3, kind: input, shape index: {}]
  %s4 = inlined_call_operand.hbm [shape: f32[32,1024], index: 4, kind: input, shape index: {}]
  %s5 = inlined_call_operand.vmem [shape: f32[32,1], index: 5, kind: input, shape index: {}]
  %s6 = inlined_call_operand.vmem [shape: f32[32,1], index: 6, kind: input, shape index: {}]
  %s7 = inlined_call_operand.vmem [shape: f32[1,128], index: 7, kind: output, shape index: {}]
  %s8 = sld [smem:[#allocation0]]
  $region50: #{cnn_model_forward.1} parent=0
    _
  %s10 = ssub.s32 1, %s8
  %s11 = scalar_select 0, %s10, %s8
  %12 = sst [smem:[#allocation3]] %s2
  $region1: #{cnn_model_forward.1} parent=0
    #allocation4 [shape = 'u8[512]{0}', space=smem, size = 0x200, scoped, tag = 'input window, operand 0, single buffered']
    #allocation5 [shape = 's32[1]{0}', space=sflag, size = 0x4, scoped, tag = 'scoped memory for cnn_model_forward.1']
    #allocation6 [shape = 's32[1]{0}', space=sflag, size = 0x4, scoped, tag = 'scoped memory for cnn_model_forward.1']
    #allocation7 [shape = 'u8[512]{0}', space=smem, size = 0x200, scoped, tag = 'input window, operand 1, single buffered']
    #allocation8 [shape = 's32[1]{0}', space=sflag, size = 0x4, scoped, tag = 'scoped memory for cnn_model_forward.1']
    #allocation9 [shape = 'u8[131072]{0}', space=vmem, size = 0x20000, scoped, tag = 'input window, operand 4, single buffered']
    %13 = vsyncpa [#allocation6], 0
    %14 = vsyncpa [#allocation8], 0
    %15 = vsyncpa [#allocation5], 0
    // Predicated region
    $region2: #{cnn_model_forward.1} parent=1 // pred_check
      _
    $region3: #{cnn_model_forward.1} parent=1 // pred_check_branch
      %17 = sbr.rel (0) target = $region5
    $region4: #{cnn_model_forward.1} parent=1 // pred_region
      %19 = vsyncadd [#allocation6], 0
      %s21 = sshll.u32 %s0, 4
      %s22 = int_to_ptr.vmem [resolvable:$true] %s21
      %24 = dma.vmem_to_smem %s22, 16, [#allocation4], [#allocation6]
    $region5: #{cnn_model_forward.1} parent=1 // pred_fallthru
      _
    // Predicated region
    $region6: #{cnn_model_forward.1} parent=1 // pred_check
      _
    $region7: #{cnn_model_forward.1} parent=1 // pred_check_branch
      %26 = sbr.rel (0) target = $region9
    $region8: #{cnn_model_forward.1} parent=1 // pred_region
      %28 = vsyncadd [#allocation8], 0
      %s30 = sshll.u32 %s1, 4
      %s31 = int_to_ptr.vmem [resolvable:$true] %s30
      %33 = dma.vmem_to_smem %s31, 16, [#allocation7], [#allocation8]
    $region9: #{cnn_model_forward.1} parent=1 // pred_fallthru
      _
    // Predicated region
    $region10: #{cnn_model_forward.1} parent=1 // pred_check
      _
    $region11: #{cnn_model_forward.1} parent=1 // pred_check_branch
      %35 = sbr.rel (0) target = $region13
    $region12: #{cnn_model_forward.1} parent=1 // pred_region
      _
    $region13: #{cnn_model_forward.1} parent=1 // pred_fallthru
      _
    // Predicated region
    $region14: #{cnn_model_forward.1} parent=1 // pred_check
      _
    $region15: #{cnn_model_forward.1} parent=1 // pred_check_branch
      %37 = sbr.rel (0) target = $region17
    $region16: #{cnn_model_forward.1} parent=1 // pred_region
      _
    $region17: #{cnn_model_forward.1} parent=1 // pred_fallthru
      _
    // Predicated region
    $region18: #{cnn_model_forward.1} parent=1 // pred_check
      _
    $region19: #{cnn_model_forward.1} parent=1 // pred_check_branch
      %39 = sbr.rel (0) target = $region21
    $region20: #{cnn_model_forward.1} parent=1 // pred_region
      %41 = vsyncadd [#allocation5], 0
      %s42 = sshll.u32 %s4, 4
      %s43 = int_to_ptr.hbm [resolvable:$true] %s42
      %s44 = sshll.u32 [#allocation9], 4
      %s45 = int_to_ptr.vmem [resolvable:$true] %s44
      %50 = dma.hbm_to_vmem [thread:$0]  %s43, 4096, %s45, [#allocation5], 1024, 1024, 64
    $region21: #{cnn_model_forward.1} parent=1 // pred_fallthru
      _
    // Predicated region
    $region22: #{cnn_model_forward.1} parent=1 // pred_check
      _
    $region23: #{cnn_model_forward.1} parent=1 // pred_check_branch
      %52 = sbr.rel (0) target = $region25
    $region24: #{cnn_model_forward.1} parent=1 // pred_region
      _
    $region25: #{cnn_model_forward.1} parent=1 // pred_fallthru
      _
    // Predicated region
    $region26: #{cnn_model_forward.1} parent=1 // pred_check
      _
    $region27: #{cnn_model_forward.1} parent=1 // pred_check_branch
      %54 = sbr.rel (0) target = $region29
    $region28: #{cnn_model_forward.1} parent=1 // pred_region
      _
    $region29: #{cnn_model_forward.1} parent=1 // pred_fallthru
      _
    // Predicated region
    $region30: #{cnn_model_forward.1} parent=1 // pred_check
      _
    $region31: #{cnn_model_forward.1} parent=1 // pred_check_branch
      %56 = sbr.rel (0) target = $region33
    $region32: #{cnn_model_forward.1} parent=1 // pred_region
      %58 = dma.done [#allocation6], 16
    $region33: #{cnn_model_forward.1} parent=1 // pred_fallthru
      _
    // Predicated region
    $region34: #{cnn_model_forward.1} parent=1 // pred_check
      _
    $region35: #{cnn_model_forward.1} parent=1 // pred_check_branch
      %60 = sbr.rel (0) target = $region37
    $region36: #{cnn_model_forward.1} parent=1 // pred_region
      %62 = dma.done [#allocation8], 16
    $region37: #{cnn_model_forward.1} parent=1 // pred_fallthru
      _
    // Predicated region
    $region38: #{cnn_model_forward.1} parent=1 // pred_check
      _
    $region39: #{cnn_model_forward.1} parent=1 // pred_check_branch
      %64 = sbr.rel (0) target = $region41
    $region40: #{cnn_model_forward.1} parent=1 // pred_region
      %66 = dma.done [#allocation5], 4096
    $region41: #{cnn_model_forward.1} parent=1 // pred_fallthru
      _
    %67 = sfence
    %v68 = vld [vmem:[%s3] sm:$0xff]
    %v69 = vld [vmem:[%s3 + $0x8] sm:$0xff]
    %v70 = vld [vmem:[%s3 + $0x10] sm:$0xff]
    %v71 = vld [vmem:[%s3 + $0x18] sm:$0xff]
    %v72 = vld [vmem:[%s3 + $0x20] sm:$0xff]
    %v73 = vld [vmem:[%s3 + $0x28] sm:$0xff]
    %v74 = vld [vmem:[%s3 + $0x30] sm:$0xff]
    %v75 = vld [vmem:[%s3 + $0x38] sm:$0xff]
    %s76 = sld [smem:[#allocation4]]
    %v77 = vstv %s76
    %v78 = vmul.f32 %v68, %v77
    %v79 = vmul.f32 %v69, %v77
    %v80 = vmul.f32 %v70, %v77
    %v81 = vmul.f32 %v71, %v77
    %v82 = vmul.f32 %v72, %v77
    %v83 = vmul.f32 %v73, %v77
    %v84 = vmul.f32 %v74, %v77
    %v85 = vmul.f32 %v75, %v77
    %s86 = sld [smem:[#allocation7]]
    %v87 = vstv %s86
    %v88 = vadd.f32 %v78, %v87
    %v89 = vadd.f32 %v79, %v87
    %v90 = vadd.f32 %v80, %v87
    %v91 = vadd.f32 %v81, %v87
    %v92 = vadd.f32 %v82, %v87
    %v93 = vadd.f32 %v83, %v87
    %v94 = vadd.f32 %v84, %v87
    %v95 = vadd.f32 %v85, %v87
    %v96 = vmax.f32 %v88, 0.0
    %v97 = vmax.f32 %v89, 0.0
    %v98 = vmax.f32 %v90, 0.0
    %v99 = vmax.f32 %v91, 0.0
    %v100 = vmax.f32 %v92, 0.0
    %v101 = vmax.f32 %v93, 0.0
    %v102 = vmax.f32 %v94, 0.0
    %v103 = vmax.f32 %v95, 0.0
    %104 = vst [vmem:[#allocation2] sm:$0xff] %v96
    %105 = vst [vmem:[#allocation2 + $0x8] sm:$0xff] %v97
    %106 = vst [vmem:[#allocation2 + $0x10] sm:$0xff] %v98
    %107 = vst [vmem:[#allocation2 + $0x18] sm:$0xff] %v99
    %108 = vst [vmem:[#allocation2 + $0x20] sm:$0xff] %v100
    %109 = vst [vmem:[#allocation2 + $0x28] sm:$0xff] %v101
    %110 = vst [vmem:[#allocation2 + $0x30] sm:$0xff] %v102
    %111 = vst [vmem:[#allocation2 + $0x38] sm:$0xff] %v103
    %s112 = sld [smem:[#allocation4 + $0x1]]
    %v113 = vstv %s112
    %v114 = vmul.f32 %v68, %v113
    %v115 = vmul.f32 %v69, %v113
    %v116 = vmul.f32 %v70, %v113
    %v117 = vmul.f32 %v71, %v113
    %v118 = vmul.f32 %v72, %v113
    %v119 = vmul.f32 %v73, %v113
    %v120 = vmul.f32 %v74, %v113
    %v121 = vmul.f32 %v75, %v113
    %s122 = sld [smem:[#allocation7 + $0x1]]
    %v123 = vstv %s122
    %v124 = vadd.f32 %v114, %v123
    %v125 = vadd.f32 %v115, %v123
    %v126 = vadd.f32 %v116, %v123
    %v127 = vadd.f32 %v117, %v123
    %v128 = vadd.f32 %v118, %v123
    %v129 = vadd.f32 %v119, %v123
    %v130 = vadd.f32 %v120, %v123
    %v131 = vadd.f32 %v121, %v123
    %v132 = vmax.f32 %v124, 0.0
    %v133 = vmax.f32 %v125, 0.0
    %v134 = vmax.f32 %v126, 0.0
    %v135 = vmax.f32 %v127, 0.0
    %v136 = vmax.f32 %v128, 0.0
    %v137 = vmax.f32 %v129, 0.0
    %v138 = vmax.f32 %v130, 0.0
    %v139 = vmax.f32 %v131, 0.0
    %140 = vst [vmem:[#allocation2 + $0x40] sm:$0xff] %v132
    %141 = vst [vmem:[#allocation2 + $0x48] sm:$0xff] %v133
    %142 = vst [vmem:[#allocation2 + $0x50] sm:$0xff] %v134
    %143 = vst [vmem:[#allocation2 + $0x58] sm:$0xff] %v135
    %144 = vst [vmem:[#allocation2 + $0x60] sm:$0xff] %v136
    %145 = vst [vmem:[#allocation2 + $0x68] sm:$0xff] %v137
    %146 = vst [vmem:[#allocation2 + $0x70] sm:$0xff] %v138
    %147 = vst [vmem:[#allocation2 + $0x78] sm:$0xff] %v139
    %s148 = sld [smem:[#allocation4 + $0x2]]
    %v149 = vstv %s148
    %v150 = vmul.f32 %v68, %v149
    %v151 = vmul.f32 %v69, %v149
    %v152 = vmul.f32 %v70, %v149
    %v153 = vmul.f32 %v71, %v149
    %v154 = vmul.f32 %v72, %v149
    %v155 = vmul.f32 %v73, %v149
    %v156 = vmul.f32 %v74, %v149
    %v157 = vmul.f32 %v75, %v149
    %s158 = sld [smem:[#allocation7 + $0x2]]
    %v159 = vstv %s158
    %v160 = vadd.f32 %v150, %v159
    %v161 = vadd.f32 %v151, %v159
    %v162 = vadd.f32 %v152, %v159
    %v163 = vadd.f32 %v153, %v159
    %v164 = vadd.f32 %v154, %v159
    %v165 = vadd.f32 %v155, %v159
    %v166 = vadd.f32 %v156, %v159
    %v167 = vadd.f32 %v157, %v159
    %v168 = vmax.f32 %v160, 0.0
    %v169 = vmax.f32 %v161, 0.0
    %v170 = vmax.f32 %v162, 0.0
    %v171 = vmax.f32 %v163, 0.0
    %v172 = vmax.f32 %v164, 0.0
    %v173 = vmax.f32 %v165, 0.0
    %v174 = vmax.f32 %v166, 0.0
    %v175 = vmax.f32 %v167, 0.0
    %176 = vst [vmem:[#allocation2 + $0x80] sm:$0xff] %v168
    %177 = vst [vmem:[#allocation2 + $0x88] sm:$0xff] %v169
    %178 = vst [vmem:[#allocation2 + $0x90] sm:$0xff] %v170
    %179 = vst [vmem:[#allocation2 + $0x98] sm:$0xff] %v171
    %180 = vst [vmem:[#allocation2 + $0xa0] sm:$0xff] %v172
    %181 = vst [vmem:[#allocation2 + $0xa8] sm:$0xff] %v173
    %182 = vst [vmem:[#allocation2 + $0xb0] sm:$0xff] %v174
    %183 = vst [vmem:[#allocation2 + $0xb8] sm:$0xff] %v175
    %s184 = sld [smem:[#allocation4 + $0x3]]
    %v185 = vstv %s184
    %v186 = vmul.f32 %v68, %v185
    %v187 = vmul.f32 %v69, %v185
    %v188 = vmul.f32 %v70, %v185
    %v189 = vmul.f32 %v71, %v185
    %v190 = vmul.f32 %v72, %v185
    %v191 = vmul.f32 %v73, %v185
    %v192 = vmul.f32 %v74, %v185
    %v193 = vmul.f32 %v75, %v185
    %s194 = sld [smem:[#allocation7 + $0x3]]
    %v195 = vstv %s194
    %v196 = vadd.f32 %v186, %v195
    %v197 = vadd.f32 %v187, %v195
    %v198 = vadd.f32 %v188, %v195
    %v199 = vadd.f32 %v189, %v195
    %v200 = vadd.f32 %v190, %v195
    %v201 = vadd.f32 %v191, %v195
    %v202 = vadd.f32 %v192, %v195
    %v203 = vadd.f32 %v193, %v195
    %v204 = vmax.f32 %v196, 0.0
    %v205 = vmax.f32 %v197, 0.0
    %v206 = vmax.f32 %v198, 0.0
    %v207 = vmax.f32 %v199, 0.0
    %v208 = vmax.f32 %v200, 0.0
    %v209 = vmax.f32 %v201, 0.0
    %v210 = vmax.f32 %v202, 0.0
    %v211 = vmax.f32 %v203, 0.0
    %212 = vst [vmem:[#allocation2 + $0xc0] sm:$0xff] %v204
    %213 = vst [vmem:[#allocation2 + $0xc8] sm:$0xff] %v205
    %214 = vst [vmem:[#allocation2 + $0xd0] sm:$0xff] %v206
    %215 = vst [vmem:[#allocation2 + $0xd8] sm:$0xff] %v207
    %216 = vst [vmem:[#allocation2 + $0xe0] sm:$0xff] %v208
    %217 = vst [vmem:[#allocation2 + $0xe8] sm:$0xff] %v209
    %218 = vst [vmem:[#allocation2 + $0xf0] sm:$0xff] %v210
    %219 = vst [vmem:[#allocation2 + $0xf8] sm:$0xff] %v211
    %s220 = sld [smem:[#allocation4 + $0x4]]
    %v221 = vstv %s220
    %v222 = vmul.f32 %v68, %v221
    %v223 = vmul.f32 %v69, %v221
    %v224 = vmul.f32 %v70, %v221
    %v225 = vmul.f32 %v71, %v221
    %v226 = vmul.f32 %v72, %v221
    %v227 = vmul.f32 %v73, %v221
    %v228 = vmul.f32 %v74, %v221
    %v229 = vmul.f32 %v75, %v221
    %s230 = sld [smem:[#allocation7 + $0x4]]
    %v231 = vstv %s230
    %v232 = vadd.f32 %v222, %v231
    %v233 = vadd.f32 %v223, %v231
    %v234 = vadd.f32 %v224, %v231
    %v235 = vadd.f32 %v225, %v231
    %v236 = vadd.f32 %v226, %v231
    %v237 = vadd.f32 %v227, %v231
    %v238 = vadd.f32 %v228, %v231
    %v239 = vadd.f32 %v229, %v231
    %v240 = vmax.f32 %v232, 0.0
    %v241 = vmax.f32 %v233, 0.0
    %v242 = vmax.f32 %v234, 0.0
    %v243 = vmax.f32 %v235, 0.0
    %v244 = vmax.f32 %v236, 0.0
    %v245 = vmax.f32 %v237, 0.0
    %v246 = vmax.f32 %v238, 0.0
    %v247 = vmax.f32 %v239, 0.0
    %248 = vst [vmem:[#allocation2 + $0x100] sm:$0xff] %v240
    %249 = vst [vmem:[#allocation2 + $0x108] sm:$0xff] %v241
    %250 = vst [vmem:[#allocation2 + $0x110] sm:$0xff] %v242
    %251 = vst [vmem:[#allocation2 + $0x118] sm:$0xff] %v243
    %252 = vst [vmem:[#allocation2 + $0x120] sm:$0xff] %v244
    %253 = vst [vmem:[#allocation2 + $0x128] sm:$0xff] %v245
    %254 = vst [vmem:[#allocation2 + $0x130] sm:$0xff] %v246
    %255 = vst [vmem:[#allocation2 + $0x138] sm:$0xff] %v247
    %s256 = sld [smem:[#allocation4 + $0x5]]
    %v257 = vstv %s256
    %v258 = vmul.f32 %v68, %v257
    %v259 = vmul.f32 %v69, %v257
    %v260 = vmul.f32 %v70, %v257
    %v261 = vmul.f32 %v71, %v257
    %v262 = vmul.f32 %v72, %v257
    %v263 = vmul.f32 %v73, %v257
    %v264 = vmul.f32 %v74, %v257
    %v265 = vmul.f32 %v75, %v257
    %s266 = sld [smem:[#allocation7 + $0x5]]
    %v267 = vstv %s266
    %v268 = vadd.f32 %v258, %v267
    %v269 = vadd.f32 %v259, %v267
    %v270 = vadd.f32 %v260, %v267
    %v271 = vadd.f32 %v261, %v267
    %v272 = vadd.f32 %v262, %v267
    %v273 = vadd.f32 %v263, %v267
    %v274 = vadd.f32 %v264, %v267
    %v275 = vadd.f32 %v265, %v267
    %v276 = vmax.f32 %v268, 0.0
    %v277 = vmax.f32 %v269, 0.0
    %v278 = vmax.f32 %v270, 0.0
    %v279 = vmax.f32 %v271, 0.0
    %v280 = vmax.f32 %v272, 0.0
    %v281 = vmax.f32 %v273, 0.0
    %v282 = vmax.f32 %v274, 0.0
    %v283 = vmax.f32 %v275, 0.0
    %284 = vst [vmem:[#allocation2 + $0x140] sm:$0xff] %v276
    %285 = vst [vmem:[#allocation2 + $0x148] sm:$0xff] %v277
    %286 = vst [vmem:[#allocation2 + $0x150] sm:$0xff] %v278
    %287 = vst [vmem:[#allocation2 + $0x158] sm:$0xff] %v279
    %288 = vst [vmem:[#allocation2 + $0x160] sm:$0xff] %v280
    %289 = vst [vmem:[#allocation2 + $0x168] sm:$0xff] %v281
    %290 = vst [vmem:[#allocation2 + $0x170] sm:$0xff] %v282
    %291 = vst [vmem:[#allocation2 + $0x178] sm:$0xff] %v283
    %s292 = sld [smem:[#allocation4 + $0x6]]
    %v293 = vstv %s292
    %v294 = vmul.f32 %v68, %v293
    %v295 = vmul.f32 %v69, %v293
    %v296 = vmul.f32 %v70, %v293
    %v297 = vmul.f32 %v71, %v293
    %v298 = vmul.f32 %v72, %v293
    %v299 = vmul.f32 %v73, %v293
    %v300 = vmul.f32 %v74, %v293
    %v301 = vmul.f32 %v75, %v293
    %s302 = sld [smem:[#allocation7 + $0x6]]
    %v303 = vstv %s302
    %v304 = vadd.f32 %v294, %v303
    %v305 = vadd.f32 %v295, %v303
    %v306 = vadd.f32 %v296, %v303
    %v307 = vadd.f32 %v297, %v303
    %v308 = vadd.f32 %v298, %v303
    %v309 = vadd.f32 %v299, %v303
    %v310 = vadd.f32 %v300, %v303
    %v311 = vadd.f32 %v301, %v303
    %v312 = vmax.f32 %v304, 0.0
    %v313 = vmax.f32 %v305, 0.0
    %v314 = vmax.f32 %v306, 0.0
    %v315 = vmax.f32 %v307, 0.0
    %v316 = vmax.f32 %v308, 0.0
    %v317 = vmax.f32 %v309, 0.0
    %v318 = vmax.f32 %v310, 0.0
    %v319 = vmax.f32 %v311, 0.0
    %320 = vst [vmem:[#allocation2 + $0x180] sm:$0xff] %v312
    %321 = vst [vmem:[#allocation2 + $0x188] sm:$0xff] %v313
    %322 = vst [vmem:[#allocation2 + $0x190] sm:$0xff] %v314
    %323 = vst [vmem:[#allocation2 + $0x198] sm:$0xff] %v315
    %324 = vst [vmem:[#allocation2 + $0x1a0] sm:$0xff] %v316
    %325 = vst [vmem:[#allocation2 + $0x1a8] sm:$0xff] %v317
    %326 = vst [vmem:[#allocation2 + $0x1b0] sm:$0xff] %v318
    %327 = vst [vmem:[#allocation2 + $0x1b8] sm:$0xff] %v319
    %s328 = sld [smem:[#allocation4 + $0x7]]
    %v329 = vstv %s328
    %v330 = vmul.f32 %v68, %v329
    %v331 = vmul.f32 %v69, %v329
    %v332 = vmul.f32 %v70, %v329
    %v333 = vmul.f32 %v71, %v329
    %v334 = vmul.f32 %v72, %v329
    %v335 = vmul.f32 %v73, %v329
    %v336 = vmul.f32 %v74, %v329
    %v337 = vmul.f32 %v75, %v329
    %s338 = sld [smem:[#allocation7 + $0x7]]
    %v339 = vstv %s338
    %v340 = vadd.f32 %v330, %v339
    %v341 = vadd.f32 %v331, %v339
    %v342 = vadd.f32 %v332, %v339
    %v343 = vadd.f32 %v333, %v339
    %v344 = vadd.f32 %v334, %v339
    %v345 = vadd.f32 %v335, %v339
    %v346 = vadd.f32 %v336, %v339
    %v347 = vadd.f32 %v337, %v339
    %v348 = vmax.f32 %v340, 0.0
    %v349 = vmax.f32 %v341, 0.0
    %v350 = vmax.f32 %v342, 0.0
    %v351 = vmax.f32 %v343, 0.0
    %v352 = vmax.f32 %v344, 0.0
    %v353 = vmax.f32 %v345, 0.0
    %v354 = vmax.f32 %v346, 0.0
    %v355 = vmax.f32 %v347, 0.0
    %356 = vst [vmem:[#allocation2 + $0x1c0] sm:$0xff] %v348
    %357 = vst [vmem:[#allocation2 + $0x1c8] sm:$0xff] %v349
    %358 = vst [vmem:[#allocation2 + $0x1d0] sm:$0xff] %v350
    %359 = vst [vmem:[#allocation2 + $0x1d8] sm:$0xff] %v351
    %360 = vst [vmem:[#allocation2 + $0x1e0] sm:$0xff] %v352
    %361 = vst [vmem:[#allocation2 + $0x1e8] sm:$0xff] %v353
    %362 = vst [vmem:[#allocation2 + $0x1f0] sm:$0xff] %v354
    %363 = vst [vmem:[#allocation2 + $0x1f8] sm:$0xff] %v355
    %s364 = sld [smem:[#allocation4 + $0x8]]
    %v365 = vstv %s364
    %v366 = vmul.f32 %v68, %v365
    %v367 = vmul.f32 %v69, %v365
    %v368 = vmul.f32 %v70, %v365
    %v369 = vmul.f32 %v71, %v365
    %v370 = vmul.f32 %v72, %v365
    %v371 = vmul.f32 %v73, %v365
    %v372 = vmul.f32 %v74, %v365
    %v373 = vmul.f32 %v75, %v365
    %s374 = sld [smem:[#allocation7 + $0x8]]
    %v375 = vstv %s374
    %v376 = vadd.f32 %v366, %v375
    %v377 = vadd.f32 %v367, %v375
    %v378 = vadd.f32 %v368, %v375
    %v379 = vadd.f32 %v369, %v375
    %v380 = vadd.f32 %v370, %v375
    %v381 = vadd.f32 %v371, %v375
    %v382 = vadd.f32 %v372, %v375
    %v383 = vadd.f32 %v373, %v375
    %v384 = vmax.f32 %v376, 0.0
    %v385 = vmax.f32 %v377, 0.0
    %v386 = vmax.f32 %v378, 0.0
    %v387 = vmax.f32 %v379, 0.0
    %v388 = vmax.f32 %v380, 0.0
    %v389 = vmax.f32 %v381, 0.0
    %v390 = vmax.f32 %v382, 0.0
    %v391 = vmax.f32 %v383, 0.0
    %392 = vst [vmem:[#allocation2 + $0x200] sm:$0xff] %v384
    %393 = vst [vmem:[#allocation2 + $0x208] sm:$0xff] %v385
    %394 = vst [vmem:[#allocation2 + $0x210] sm:$0xff] %v386
    %395 = vst [vmem:[#allocation2 + $0x218] sm:$0xff] %v387
    %396 = vst [vmem:[#allocation2 + $0x220] sm:$0xff] %v388
    %397 = vst [vmem:[#allocation2 + $0x228] sm:$0xff] %v389
    %398 = vst [vmem:[#allocation2 + $0x230] sm:$0xff] %v390
    %399 = vst [vmem:[#allocation2 + $0x238] sm:$0xff] %v391
    %s400 = sld [smem:[#allocation4 + $0x9]]
    %v401 = vstv %s400
    %v402 = vmul.f32 %v68, %v401
    %v403 = vmul.f32 %v69, %v401
    %v404 = vmul.f32 %v70, %v401
    %v405 = vmul.f32 %v71, %v401
    %v406 = vmul.f32 %v72, %v401
    %v407 = vmul.f32 %v73, %v401
    %v408 = vmul.f32 %v74, %v401
    %v409 = vmul.f32 %v75, %v401
    %s410 = sld [smem:[#allocation7 + $0x9]]
    %v411 = vstv %s410
    %v412 = vadd.f32 %v402, %v411
    %v413 = vadd.f32 %v403, %v411
    %v414 = vadd.f32 %v404, %v411
    %v415 = vadd.f32 %v405, %v411
    %v416 = vadd.f32 %v406, %v411
    %v417 = vadd.f32 %v407, %v411
    %v418 = vadd.f32 %v408, %v411
    %v419 = vadd.f32 %v409, %v411
    %v420 = vmax.f32 %v412, 0.0
    %v421 = vmax.f32 %v413, 0.0
    %v422 = vmax.f32 %v414, 0.0
    %v423 = vmax.f32 %v415, 0.0
    %v424 = vmax.f32 %v416, 0.0
    %v425 = vmax.f32 %v417, 0.0
    %v426 = vmax.f32 %v418, 0.0
    %v427 = vmax.f32 %v419, 0.0
    %428 = vst [vmem:[#allocation2 + $0x240] sm:$0xff] %v420
    %429 = vst [vmem:[#allocation2 + $0x248] sm:$0xff] %v421
    %430 = vst [vmem:[#allocation2 + $0x250] sm:$0xff] %v422
    %431 = vst [vmem:[#allocation2 + $0x258] sm:$0xff] %v423
    %432 = vst [vmem:[#allocation2 + $0x260] sm:$0xff] %v424
    %433 = vst [vmem:[#allocation2 + $0x268] sm:$0xff] %v425
    %434 = vst [vmem:[#allocation2 + $0x270] sm:$0xff] %v426
    %435 = vst [vmem:[#allocation2 + $0x278] sm:$0xff] %v427
    %s436 = sld [smem:[#allocation4 + $0xa]]
    %v437 = vstv %s436
    %v438 = vmul.f32 %v68, %v437
    %v439 = vmul.f32 %v69, %v437
    %v440 = vmul.f32 %v70, %v437
    %v441 = vmul.f32 %v71, %v437
    %v442 = vmul.f32 %v72, %v437
    %v443 = vmul.f32 %v73, %v437
    %v444 = vmul.f32 %v74, %v437
    %v445 = vmul.f32 %v75, %v437
    %s446 = sld [smem:[#allocation7 + $0xa]]
    %v447 = vstv %s446
    %v448 = vadd.f32 %v438, %v447
    %v449 = vadd.f32 %v439, %v447
    %v450 = vadd.f32 %v440, %v447
    %v451 = vadd.f32 %v441, %v447
    %v452 = vadd.f32 %v442, %v447
    %v453 = vadd.f32 %v443, %v447
    %v454 = vadd.f32 %v444, %v447
    %v455 = vadd.f32 %v445, %v447
    %v456 = vmax.f32 %v448, 0.0
    %v457 = vmax.f32 %v449, 0.0
    %v458 = vmax.f32 %v450, 0.0
    %v459 = vmax.f32 %v451, 0.0
    %v460 = vmax.f32 %v452, 0.0
    %v461 = vmax.f32 %v453, 0.0
    %v462 = vmax.f32 %v454, 0.0
    %v463 = vmax.f32 %v455, 0.0
    %464 = vst [vmem:[#allocation2 + $0x280] sm:$0xff] %v456
    %465 = vst [vmem:[#allocation2 + $0x288] sm:$0xff] %v457
    %466 = vst [vmem:[#allocation2 + $0x290] sm:$0xff] %v458
    %467 = vst [vmem:[#allocation2 + $0x298] sm:$0xff] %v459
    %468 = vst [vmem:[#allocation2 + $0x2a0] sm:$0xff] %v460
    %469 = vst [vmem:[#allocation2 + $0x2a8] sm:$0xff] %v461
    %470 = vst [vmem:[#allocation2 + $0x2b0] sm:$0xff] %v462
    %471 = vst [vmem:[#allocation2 + $0x2b8] sm:$0xff] %v463
    %s472 = sld [smem:[#allocation4 + $0xb]]
    %v473 = vstv %s472
    %v474 = vmul.f32 %v68, %v473
    %v475 = vmul.f32 %v69, %v473
    %v476 = vmul.f32 %v70, %v473
    %v477 = vmul.f32 %v71, %v473
    %v478 = vmul.f32 %v72, %v473
    %v479 = vmul.f32 %v73, %v473
    %v480 = vmul.f32 %v74, %v473
    %v481 = vmul.f32 %v75, %v473
    %s482 = sld [smem:[#allocation7 + $0xb]]
    %v483 = vstv %s482
    %v484 = vadd.f32 %v474, %v483
    %v485 = vadd.f32 %v475, %v483
    %v486 = vadd.f32 %v476, %v483
    %v487 = vadd.f32 %v477, %v483
    %v488 = vadd.f32 %v478, %v483
    %v489 = vadd.f32 %v479, %v483
    %v490 = vadd.f32 %v480, %v483
    %v491 = vadd.f32 %v481, %v483
    %v492 = vmax.f32 %v484, 0.0
    %v493 = vmax.f32 %v485, 0.0
    %v494 = vmax.f32 %v486, 0.0
    %v495 = vmax.f32 %v487, 0.0
    %v496 = vmax.f32 %v488, 0.0
    %v497 = vmax.f32 %v489, 0.0
    %v498 = vmax.f32 %v490, 0.0
    %v499 = vmax.f32 %v491, 0.0
    %500 = vst [vmem:[#allocation2 + $0x2c0] sm:$0xff] %v492
    %501 = vst [vmem:[#allocation2 + $0x2c8] sm:$0xff] %v493
    %502 = vst [vmem:[#allocation2 + $0x2d0] sm:$0xff] %v494
    %503 = vst [vmem:[#allocation2 + $0x2d8] sm:$0xff] %v495
    %504 = vst [vmem:[#allocation2 + $0x2e0] sm:$0xff] %v496
    %505 = vst [vmem:[#allocation2 + $0x2e8] sm:$0xff] %v497
    %506 = vst [vmem:[#allocation2 + $0x2f0] sm:$0xff] %v498
    %507 = vst [vmem:[#allocation2 + $0x2f8] sm:$0xff] %v499
    %s508 = sld [smem:[#allocation4 + $0xc]]
    %v509 = vstv %s508
    %v510 = vmul.f32 %v68, %v509
    %v511 = vmul.f32 %v69, %v509
    %v512 = vmul.f32 %v70, %v509
    %v513 = vmul.f32 %v71, %v509
    %v514 = vmul.f32 %v72, %v509
    %v515 = vmul.f32 %v73, %v509
    %v516 = vmul.f32 %v74, %v509
    %v517 = vmul.f32 %v75, %v509
    %s518 = sld [smem:[#allocation7 + $0xc]]
    %v519 = vstv %s518
    %v520 = vadd.f32 %v510, %v519
    %v521 = vadd.f32 %v511, %v519
    %v522 = vadd.f32 %v512, %v519
    %v523 = vadd.f32 %v513, %v519
    %v524 = vadd.f32 %v514, %v519
    %v525 = vadd.f32 %v515, %v519
    %v526 = vadd.f32 %v516, %v519
    %v527 = vadd.f32 %v517, %v519
    %v528 = vmax.f32 %v520, 0.0
    %v529 = vmax.f32 %v521, 0.0
    %v530 = vmax.f32 %v522, 0.0
    %v531 = vmax.f32 %v523, 0.0
    %v532 = vmax.f32 %v524, 0.0
    %v533 = vmax.f32 %v525, 0.0
    %v534 = vmax.f32 %v526, 0.0
    %v535 = vmax.f32 %v527, 0.0
    %536 = vst [vmem:[#allocation2 + $0x300] sm:$0xff] %v528
    %537 = vst [vmem:[#allocation2 + $0x308] sm:$0xff] %v529
    %538 = vst [vmem:[#allocation2 + $0x310] sm:$0xff] %v530
    %539 = vst [vmem:[#allocation2 + $0x318] sm:$0xff] %v531
    %540 = vst [vmem:[#allocation2 + $0x320] sm:$0xff] %v532
    %541 = vst [vmem:[#allocation2 + $0x328] sm:$0xff] %v533
    %542 = vst [vmem:[#allocation2 + $0x330] sm:$0xff] %v534
    %543 = vst [vmem:[#allocation2 + $0x338] sm:$0xff] %v535
    %s544 = sld [smem:[#allocation4 + $0xd]]
    %v545 = vstv %s544
    %v546 = vmul.f32 %v68, %v545
    %v547 = vmul.f32 %v69, %v545
    %v548 = vmul.f32 %v70, %v545
    %v549 = vmul.f32 %v71, %v545
    %v550 = vmul.f32 %v72, %v545
    %v551 = vmul.f32 %v73, %v545
    %v552 = vmul.f32 %v74, %v545
    %v553 = vmul.f32 %v75, %v545
    %s554 = sld [smem:[#allocation7 + $0xd]]
    %v555 = vstv %s554
    %v556 = vadd.f32 %v546, %v555
    %v557 = vadd.f32 %v547, %v555
    %v558 = vadd.f32 %v548, %v555
    %v559 = vadd.f32 %v549, %v555
    %v560 = vadd.f32 %v550, %v555
    %v561 = vadd.f32 %v551, %v555
    %v562 = vadd.f32 %v552, %v555
    %v563 = vadd.f32 %v553, %v555
    %v564 = vmax.f32 %v556, 0.0
    %v565 = vmax.f32 %v557, 0.0
    %v566 = vmax.f32 %v558, 0.0
    %v567 = vmax.f32 %v559, 0.0
    %v568 = vmax.f32 %v560, 0.0
    %v569 = vmax.f32 %v561, 0.0
    %v570 = vmax.f32 %v562, 0.0
    %v571 = vmax.f32 %v563, 0.0
    %572 = vst [vmem:[#allocation2 + $0x340] sm:$0xff] %v564
    %573 = vst [vmem:[#allocation2 + $0x348] sm:$0xff] %v565
    %574 = vst [vmem:[#allocation2 + $0x350] sm:$0xff] %v566
    %575 = vst [vmem:[#allocation2 + $0x358] sm:$0xff] %v567
    %576 = vst [vmem:[#allocation2 + $0x360] sm:$0xff] %v568
    %577 = vst [vmem:[#allocation2 + $0x368] sm:$0xff] %v569
    %578 = vst [vmem:[#allocation2 + $0x370] sm:$0xff] %v570
    %579 = vst [vmem:[#allocation2 + $0x378] sm:$0xff] %v571
    %s580 = sld [smem:[#allocation4 + $0xe]]
    %v581 = vstv %s580
    %v582 = vmul.f32 %v68, %v581
    %v583 = vmul.f32 %v69, %v581
    %v584 = vmul.f32 %v70, %v581
    %v585 = vmul.f32 %v71, %v581
    %v586 = vmul.f32 %v72, %v581
    %v587 = vmul.f32 %v73, %v581
    %v588 = vmul.f32 %v74, %v581
    %v589 = vmul.f32 %v75, %v581
    %s590 = sld [smem:[#allocation7 + $0xe]]
    %v591 = vstv %s590
    %v592 = vadd.f32 %v582, %v591
    %v593 = vadd.f32 %v583, %v591
    %v594 = vadd.f32 %v584, %v591
    %v595 = vadd.f32 %v585, %v591
    %v596 = vadd.f32 %v586, %v591
    %v597 = vadd.f32 %v587, %v591
    %v598 = vadd.f32 %v588, %v591
    %v599 = vadd.f32 %v589, %v591
    %v600 = vmax.f32 %v592, 0.0
    %v601 = vmax.f32 %v593, 0.0
    %v602 = vmax.f32 %v594, 0.0
    %v603 = vmax.f32 %v595, 0.0
    %v604 = vmax.f32 %v596, 0.0
    %v605 = vmax.f32 %v597, 0.0
    %v606 = vmax.f32 %v598, 0.0
    %v607 = vmax.f32 %v599, 0.0
    %608 = vst [vmem:[#allocation2 + $0x380] sm:$0xff] %v600
    %609 = vst [vmem:[#allocation2 + $0x388] sm:$0xff] %v601
    %610 = vst [vmem:[#allocation2 + $0x390] sm:$0xff] %v602
    %611 = vst [vmem:[#allocation2 + $0x398] sm:$0xff] %v603
    %612 = vst [vmem:[#allocation2 + $0x3a0] sm:$0xff] %v604
    %613 = vst [vmem:[#allocation2 + $0x3a8] sm:$0xff] %v605
    %614 = vst [vmem:[#allocation2 + $0x3b0] sm:$0xff] %v606
    %615 = vst [vmem:[#allocation2 + $0x3b8] sm:$0xff] %v607
    %s616 = sld [smem:[#allocation4 + $0xf]]
    %v617 = vstv %s616
    %v618 = vmul.f32 %v68, %v617
    %v619 = vmul.f32 %v69, %v617
    %v620 = vmul.f32 %v70, %v617
    %v621 = vmul.f32 %v71, %v617
    %v622 = vmul.f32 %v72, %v617
    %v623 = vmul.f32 %v73, %v617
    %v624 = vmul.f32 %v74, %v617
    %v625 = vmul.f32 %v75, %v617
    %s626 = sld [smem:[#allocation7 + $0xf]]
    %v627 = vstv %s626
    %v628 = vadd.f32 %v618, %v627
    %v629 = vadd.f32 %v619, %v627
    %v630 = vadd.f32 %v620, %v627
    %v631 = vadd.f32 %v621, %v627
    %v632 = vadd.f32 %v622, %v627
    %v633 = vadd.f32 %v623, %v627
    %v634 = vadd.f32 %v624, %v627
    %v635 = vadd.f32 %v625, %v627
    %v636 = vmax.f32 %v628, 0.0
    %v637 = vmax.f32 %v629, 0.0
    %v638 = vmax.f32 %v630, 0.0
    %v639 = vmax.f32 %v631, 0.0
    %v640 = vmax.f32 %v632, 0.0
    %v641 = vmax.f32 %v633, 0.0
    %v642 = vmax.f32 %v634, 0.0
    %v643 = vmax.f32 %v635, 0.0
    %644 = vst [vmem:[#allocation2 + $0x3c0] sm:$0xff] %v636
    %645 = vst [vmem:[#allocation2 + $0x3c8] sm:$0xff] %v637
    %646 = vst [vmem:[#allocation2 + $0x3d0] sm:$0xff] %v638
    %647 = vst [vmem:[#allocation2 + $0x3d8] sm:$0xff] %v639
    %648 = vst [vmem:[#allocation2 + $0x3e0] sm:$0xff] %v640
    %649 = vst [vmem:[#allocation2 + $0x3e8] sm:$0xff] %v641
    %650 = vst [vmem:[#allocation2 + $0x3f0] sm:$0xff] %v642
    %651 = vst [vmem:[#allocation2 + $0x3f8] sm:$0xff] %v643
    %v652 = vld [vmem:[#allocation9] sm:$0xff]
    %v653 = vld [vmem:[#allocation9 + $0x8] sm:$0xff]
    %v654 = vld [vmem:[#allocation9 + $0x10] sm:$0xff]
    %v655 = vld [vmem:[#allocation9 + $0x18] sm:$0xff]
    %v656 = vld [vmem:[#allocation9 + $0x20] sm:$0xff]
    %v657 = vld [vmem:[#allocation9 + $0x28] sm:$0xff]
    %v658 = vld [vmem:[#allocation9 + $0x30] sm:$0xff]
    %v659 = vld [vmem:[#allocation9 + $0x38] sm:$0xff]
    %v660 = vld [vmem:[#allocation9 + $0x40] sm:$0xff]
    %v661 = vld [vmem:[#allocation9 + $0x48] sm:$0xff]
    %v662 = vld [vmem:[#allocation9 + $0x50] sm:$0xff]
    %v663 = vld [vmem:[#allocation9 + $0x58] sm:$0xff]
    %v664 = vld [vmem:[#allocation9 + $0x60] sm:$0xff]
    %v665 = vld [vmem:[#allocation9 + $0x68] sm:$0xff]
    %v666 = vld [vmem:[#allocation9 + $0x70] sm:$0xff]
    %v667 = vld [vmem:[#allocation9 + $0x78] sm:$0xff]
    %v668 = vld [vmem:[#allocation9 + $0x80] sm:$0xff]
    %v669 = vld [vmem:[#allocation9 + $0x88] sm:$0xff]
    %v670 = vld [vmem:[#allocation9 + $0x90] sm:$0xff]
    %v671 = vld [vmem:[#allocation9 + $0x98] sm:$0xff]
    %v672 = vld [vmem:[#allocation9 + $0xa0] sm:$0xff]
    %v673 = vld [vmem:[#allocation9 + $0xa8] sm:$0xff]
    %v674 = vld [vmem:[#allocation9 + $0xb0] sm:$0xff]
    %v675 = vld [vmem:[#allocation9 + $0xb8] sm:$0xff]
    %v676 = vld [vmem:[#allocation9 + $0xc0] sm:$0xff]
    %v677 = vld [vmem:[#allocation9 + $0xc8] sm:$0xff]
    %v678 = vld [vmem:[#allocation9 + $0xd0] sm:$0xff]
    %v679 = vld [vmem:[#allocation9 + $0xd8] sm:$0xff]
    %v680 = vld [vmem:[#allocation9 + $0xe0] sm:$0xff]
    %v681 = vld [vmem:[#allocation9 + $0xe8] sm:$0xff]
    %v682 = vld [vmem:[#allocation9 + $0xf0] sm:$0xff]
    %v683 = vld [vmem:[#allocation9 + $0xf8] sm:$0xff]
    %v684 = vld [vmem:[#allocation2] sm:$0xff]
    %v685 = vld [vmem:[#allocation2 + $0x8] sm:$0xff]
    %v686 = vld [vmem:[#allocation2 + $0x10] sm:$0xff]
    %v687 = vld [vmem:[#allocation2 + $0x18] sm:$0xff]
    %v688 = vld [vmem:[#allocation2 + $0x20] sm:$0xff]
    %v689 = vld [vmem:[#allocation2 + $0x28] sm:$0xff]
    %v690 = vld [vmem:[#allocation2 + $0x30] sm:$0xff]
    %v691 = vld [vmem:[#allocation2 + $0x38] sm:$0xff]
    %v692 = vld [vmem:[#allocation2 + $0x40] sm:$0xff]
    %v693 = vld [vmem:[#allocation2 + $0x48] sm:$0xff]
    %v694 = vld [vmem:[#allocation2 + $0x50] sm:$0xff]
    %v695 = vld [vmem:[#allocation2 + $0x58] sm:$0xff]
    %v696 = vld [vmem:[#allocation2 + $0x60] sm:$0xff]
    %v697 = vld [vmem:[#allocation2 + $0x68] sm:$0xff]
    %v698 = vld [vmem:[#allocation2 + $0x70] sm:$0xff]
    %v699 = vld [vmem:[#allocation2 + $0x78] sm:$0xff]
    %v700 = vld [vmem:[#allocation2 + $0x80] sm:$0xff]
    %v701 = vld [vmem:[#allocation2 + $0x88] sm:$0xff]
    %v702 = vld [vmem:[#allocation2 + $0x90] sm:$0xff]
    %v703 = vld [vmem:[#allocation2 + $0x98] sm:$0xff]
    %v704 = vld [vmem:[#allocation2 + $0xa0] sm:$0xff]
    %v705 = vld [vmem:[#allocation2 + $0xa8] sm:$0xff]
    %v706 = vld [vmem:[#allocation2 + $0xb0] sm:$0xff]
    %v707 = vld [vmem:[#allocation2 + $0xb8] sm:$0xff]
    %v708 = vld [vmem:[#allocation2 + $0xc0] sm:$0xff]
    %v709 = vld [vmem:[#allocation2 + $0xc8] sm:$0xff]
    %v710 = vld [vmem:[#allocation2 + $0xd0] sm:$0xff]
    %v711 = vld [vmem:[#allocation2 + $0xd8] sm:$0xff]
    %v712 = vld [vmem:[#allocation2 + $0xe0] sm:$0xff]
    %v713 = vld [vmem:[#allocation2 + $0xe8] sm:$0xff]
    %v714 = vld [vmem:[#allocation2 + $0xf0] sm:$0xff]
    %v715 = vld [vmem:[#allocation2 + $0xf8] sm:$0xff]
    %v716 = vld [vmem:[#allocation2 + $0x100] sm:$0xff]
    %v717 = vld [vmem:[#allocation2 + $0x108] sm:$0xff]
    %v718 = vld [vmem:[#allocation2 + $0x110] sm:$0xff]
    %v719 = vld [vmem:[#allocation2 + $0x118] sm:$0xff]
    %v720 = vld [vmem:[#allocation2 + $0x120] sm:$0xff]
    %v721 = vld [vmem:[#allocation2 + $0x128] sm:$0xff]
    %v722 = vld [vmem:[#allocation2 + $0x130] sm:$0xff]
    %v723 = vld [vmem:[#allocation2 + $0x138] sm:$0xff]
    %v724 = vld [vmem:[#allocation2 + $0x140] sm:$0xff]
    %v725 = vld [vmem:[#allocation2 + $0x148] sm:$0xff]
    %v726 = vld [vmem:[#allocation2 + $0x150] sm:$0xff]
    %v727 = vld [vmem:[#allocation2 + $0x158] sm:$0xff]
    %v728 = vld [vmem:[#allocation2 + $0x160] sm:$0xff]
    %v729 = vld [vmem:[#allocation2 + $0x168] sm:$0xff]
    %v730 = vld [vmem:[#allocation2 + $0x170] sm:$0xff]
    %v731 = vld [vmem:[#allocation2 + $0x178] sm:$0xff]
    %v732 = vld [vmem:[#allocation2 + $0x180] sm:$0xff]
    %v733 = vld [vmem:[#allocation2 + $0x188] sm:$0xff]
    %v734 = vld [vmem:[#allocation2 + $0x190] sm:$0xff]
    %v735 = vld [vmem:[#allocation2 + $0x198] sm:$0xff]
    %v736 = vld [vmem:[#allocation2 + $0x1a0] sm:$0xff]
    %v737 = vld [vmem:[#allocation2 + $0x1a8] sm:$0xff]
    %v738 = vld [vmem:[#allocation2 + $0x1b0] sm:$0xff]
    %v739 = vld [vmem:[#allocation2 + $0x1b8] sm:$0xff]
    %v740 = vld [vmem:[#allocation2 + $0x1c0] sm:$0xff]
    %v741 = vld [vmem:[#allocation2 + $0x1c8] sm:$0xff]
    %v742 = vld [vmem:[#allocation2 + $0x1d0] sm:$0xff]
    %v743 = vld [vmem:[#allocation2 + $0x1d8] sm:$0xff]
    %v744 = vld [vmem:[#allocation2 + $0x1e0] sm:$0xff]
    %v745 = vld [vmem:[#allocation2 + $0x1e8] sm:$0xff]
    %v746 = vld [vmem:[#allocation2 + $0x1f0] sm:$0xff]
    %v747 = vld [vmem:[#allocation2 + $0x1f8] sm:$0xff]
    %v748 = vld [vmem:[#allocation2 + $0x200] sm:$0xff]
    %v749 = vld [vmem:[#allocation2 + $0x208] sm:$0xff]
    %v750 = vld [vmem:[#allocation2 + $0x210] sm:$0xff]
    %v751 = vld [vmem:[#allocation2 + $0x218] sm:$0xff]
    %v752 = vld [vmem:[#allocation2 + $0x220] sm:$0xff]
    %v753 = vld [vmem:[#allocation2 + $0x228] sm:$0xff]
    %v754 = vld [vmem:[#allocation2 + $0x230] sm:$0xff]
    %v755 = vld [vmem:[#allocation2 + $0x238] sm:$0xff]
    %v756 = vld [vmem:[#allocation2 + $0x240] sm:$0xff]
    %v757 = vld [vmem:[#allocation2 + $0x248] sm:$0xff]
    %v758 = vld [vmem:[#allocation2 + $0x250] sm:$0xff]
    %v759 = vld [vmem:[#allocation2 + $0x258] sm:$0xff]
    %v760 = vld [vmem:[#allocation2 + $0x260] sm:$0xff]
    %v761 = vld [vmem:[#allocation2 + $0x268] sm:$0xff]
    %v762 = vld [vmem:[#allocation2 + $0x270] sm:$0xff]
    %v763 = vld [vmem:[#allocation2 + $0x278] sm:$0xff]
    %v764 = vld [vmem:[#allocation2 + $0x280] sm:$0xff]
    %v765 = vld [vmem:[#allocation2 + $0x288] sm:$0xff]
    %v766 = vld [vmem:[#allocation2 + $0x290] sm:$0xff]
    %v767 = vld [vmem:[#allocation2 + $0x298] sm:$0xff]
    %v768 = vld [vmem:[#allocation2 + $0x2a0] sm:$0xff]
    %v769 = vld [vmem:[#allocation2 + $0x2a8] sm:$0xff]
    %v770 = vld [vmem:[#allocation2 + $0x2b0] sm:$0xff]
    %v771 = vld [vmem:[#allocation2 + $0x2b8] sm:$0xff]
    %v772 = vld [vmem:[#allocation2 + $0x2c0] sm:$0xff]
    %v773 = vld [vmem:[#allocation2 + $0x2c8] sm:$0xff]
    %v774 = vld [vmem:[#allocation2 + $0x2d0] sm:$0xff]
    %v775 = vld [vmem:[#allocation2 + $0x2d8] sm:$0xff]
    %v776 = vld [vmem:[#allocation2 + $0x2e0] sm:$0xff]
    %v777 = vld [vmem:[#allocation2 + $0x2e8] sm:$0xff]
    %v778 = vld [vmem:[#allocation2 + $0x2f0] sm:$0xff]
    %v779 = vld [vmem:[#allocation2 + $0x2f8] sm:$0xff]
    %v780 = vld [vmem:[#allocation2 + $0x300] sm:$0xff]
    %v781 = vld [vmem:[#allocation2 + $0x308] sm:$0xff]
    %v782 = vld [vmem:[#allocation2 + $0x310] sm:$0xff]
    %v783 = vld [vmem:[#allocation2 + $0x318] sm:$0xff]
    %v784 = vld [vmem:[#allocation2 + $0x320] sm:$0xff]
    %v785 = vld [vmem:[#allocation2 + $0x328] sm:$0xff]
    %v786 = vld [vmem:[#allocation2 + $0x330] sm:$0xff]
    %v787 = vld [vmem:[#allocation2 + $0x338] sm:$0xff]
    %v788 = vld [vmem:[#allocation2 + $0x340] sm:$0xff]
    %v789 = vld [vmem:[#allocation2 + $0x348] sm:$0xff]
    %v790 = vld [vmem:[#allocation2 + $0x350] sm:$0xff]
    %v791 = vld [vmem:[#allocation2 + $0x358] sm:$0xff]
    %v792 = vld [vmem:[#allocation2 + $0x360] sm:$0xff]
    %v793 = vld [vmem:[#allocation2 + $0x368] sm:$0xff]
    %v794 = vld [vmem:[#allocation2 + $0x370] sm:$0xff]
    %v795 = vld [vmem:[#allocation2 + $0x378] sm:$0xff]
    %v796 = vld [vmem:[#allocation2 + $0x380] sm:$0xff]
    %v797 = vld [vmem:[#allocation2 + $0x388] sm:$0xff]
    %v798 = vld [vmem:[#allocation2 + $0x390] sm:$0xff]
    %v799 = vld [vmem:[#allocation2 + $0x398] sm:$0xff]
    %v800 = vld [vmem:[#allocation2 + $0x3a0] sm:$0xff]
    %v801 = vld [vmem:[#allocation2 + $0x3a8] sm:$0xff]
    %v802 = vld [vmem:[#allocation2 + $0x3b0] sm:$0xff]
    %v803 = vld [vmem:[#allocation2 + $0x3b8] sm:$0xff]
    %v804 = vld [vmem:[#allocation2 + $0x3c0] sm:$0xff]
    %v805 = vld [vmem:[#allocation2 + $0x3c8] sm:$0xff]
    %v806 = vld [vmem:[#allocation2 + $0x3d0] sm:$0xff]
    %v807 = vld [vmem:[#allocation2 + $0x3d8] sm:$0xff]
    %v808 = vld [vmem:[#allocation2 + $0x3e0] sm:$0xff]
    %v809 = vld [vmem:[#allocation2 + $0x3e8] sm:$0xff]
    %v810 = vld [vmem:[#allocation2 + $0x3f0] sm:$0xff]
    %v811 = vld [vmem:[#allocation2 + $0x3f8] sm:$0xff]
    %v812 = vld [vmem:[%s5] sm:$0xff]
    %v813 = vld [vmem:[%s5 + $0x8] sm:$0xff]
    %v814 = vld [vmem:[%s5 + $0x10] sm:$0xff]
    %v815 = vld [vmem:[%s5 + $0x18] sm:$0xff]
    %817 = vset.pattern.permute.xlu0 0
    %818 = vperm.xlu0 %817, %v812
    %v819 = vpop.permute.xlu0 %818
    %822 = vset.pattern.permute.xlu0 0
    %823 = vperm.xlu0 %822, %v813
    %v824 = vpop.permute.xlu0 %823
    %827 = vset.pattern.permute.xlu0 0
    %828 = vperm.xlu0 %827, %v814
    %v829 = vpop.permute.xlu0 %828
    %832 = vset.pattern.permute.xlu0 0
    %833 = vperm.xlu0 %832, %v815
    %v834 = vpop.permute.xlu0 %833
    %836 = vmatpush.msra.mxu0 %v699
    %837 = vmatpush.msra.mxu0 %v698
    %838 = vmatpush.msra.mxu0 %v697
    %839 = vmatpush.msra.mxu0 %v696
    %840 = vmatpush.msra.mxu0 %v695
    %841 = vmatpush.msra.mxu0 %v694
    %842 = vmatpush.msra.mxu0 %v693
    %843 = vmatpush.msra.mxu0 %v692
    %844 = vmatpush.msra.mxu0 %v691
    %845 = vmatpush.msra.mxu0 %v690
    %846 = vmatpush.msra.mxu0 %v689
    %847 = vmatpush.msra.mxu0 %v688
    %848 = vmatpush.msra.mxu0 %v687
    %849 = vmatpush.msra.mxu0 %v686
    %850 = vmatpush.msra.mxu0 %v685
    %851 = vmatpush.msra.mxu0 %v684
    %852 = vmatmul.f32.gmra.mxu0 %v652
    %v853 = vpop.f32.mrf.mxu0
    %v854 = vadd.f32 %v819, %v853
    %855 = vmatmul.f32.gmra.mxu0 %v660
    %v856 = vpop.f32.mrf.mxu0
    %v857 = vadd.f32 %v824, %v856
    %858 = vmatmul.f32.gmra.mxu0 %v668
    %v859 = vpop.f32.mrf.mxu0
    %v860 = vadd.f32 %v829, %v859
    %861 = vmatmul.f32.gmra.mxu0 %v676
    %v862 = vpop.f32.mrf.mxu0
    %v863 = vadd.f32 %v834, %v862
    %864 = vdwg.mxu0
    %865 = vmatpush.msra.mxu0 %v715
    %866 = vmatpush.msra.mxu0 %v714
    %867 = vmatpush.msra.mxu0 %v713
    %868 = vmatpush.msra.mxu0 %v712
    %869 = vmatpush.msra.mxu0 %v711
    %870 = vmatpush.msra.mxu0 %v710
    %871 = vmatpush.msra.mxu0 %v709
    %872 = vmatpush.msra.mxu0 %v708
    %873 = vmatpush.msra.mxu0 %v707
    %874 = vmatpush.msra.mxu0 %v706
    %875 = vmatpush.msra.mxu0 %v705
    %876 = vmatpush.msra.mxu0 %v704
    %877 = vmatpush.msra.mxu0 %v703
    %878 = vmatpush.msra.mxu0 %v702
    %879 = vmatpush.msra.mxu0 %v701
    %880 = vmatpush.msra.mxu0 %v700
    %881 = vmatmul.f32.gmra.mxu0 %v653
    %v882 = vpop.f32.mrf.mxu0
    %v883 = vadd.f32 %v854, %v882
    %884 = vmatmul.f32.gmra.mxu0 %v661
    %v885 = vpop.f32.mrf.mxu0
    %v886 = vadd.f32 %v857, %v885
    %887 = vmatmul.f32.gmra.mxu0 %v669
    %v888 = vpop.f32.mrf.mxu0
    %v889 = vadd.f32 %v860, %v888
    %890 = vmatmul.f32.gmra.mxu0 %v677
    %v891 = vpop.f32.mrf.mxu0
    %v892 = vadd.f32 %v863, %v891
    %893 = vdwg.mxu0
    %894 = vmatpush.msra.mxu0 %v731
    %895 = vmatpush.msra.mxu0 %v730
    %896 = vmatpush.msra.mxu0 %v729
    %897 = vmatpush.msra.mxu0 %v728
    %898 = vmatpush.msra.mxu0 %v727
    %899 = vmatpush.msra.mxu0 %v726
    %900 = vmatpush.msra.mxu0 %v725
    %901 = vmatpush.msra.mxu0 %v724
    %902 = vmatpush.msra.mxu0 %v723
    %903 = vmatpush.msra.mxu0 %v722
    %904 = vmatpush.msra.mxu0 %v721
    %905 = vmatpush.msra.mxu0 %v720
    %906 = vmatpush.msra.mxu0 %v719
    %907 = vmatpush.msra.mxu0 %v718
    %908 = vmatpush.msra.mxu0 %v717
    %909 = vmatpush.msra.mxu0 %v716
    %910 = vmatmul.f32.gmra.mxu0 %v654
    %v911 = vpop.f32.mrf.mxu0
    %v912 = vadd.f32 %v883, %v911
    %913 = vmatmul.f32.gmra.mxu0 %v662
    %v914 = vpop.f32.mrf.mxu0
    %v915 = vadd.f32 %v886, %v914
    %916 = vmatmul.f32.gmra.mxu0 %v670
    %v917 = vpop.f32.mrf.mxu0
    %v918 = vadd.f32 %v889, %v917
    %919 = vmatmul.f32.gmra.mxu0 %v678
    %v920 = vpop.f32.mrf.mxu0
    %v921 = vadd.f32 %v892, %v920
    %922 = vdwg.mxu0
    %923 = vmatpush.msra.mxu0 %v747
    %924 = vmatpush.msra.mxu0 %v746
    %925 = vmatpush.msra.mxu0 %v745
    %926 = vmatpush.msra.mxu0 %v744
    %927 = vmatpush.msra.mxu0 %v743
    %928 = vmatpush.msra.mxu0 %v742
    %929 = vmatpush.msra.mxu0 %v741
    %930 = vmatpush.msra.mxu0 %v740
    %931 = vmatpush.msra.mxu0 %v739
    %932 = vmatpush.msra.mxu0 %v738
    %933 = vmatpush.msra.mxu0 %v737
    %934 = vmatpush.msra.mxu0 %v736
    %935 = vmatpush.msra.mxu0 %v735
    %936 = vmatpush.msra.mxu0 %v734
    %937 = vmatpush.msra.mxu0 %v733
    %938 = vmatpush.msra.mxu0 %v732
    %939 = vmatmul.f32.gmra.mxu0 %v655
    %v940 = vpop.f32.mrf.mxu0
    %v941 = vadd.f32 %v912, %v940
    %942 = vmatmul.f32.gmra.mxu0 %v663
    %v943 = vpop.f32.mrf.mxu0
    %v944 = vadd.f32 %v915, %v943
    %945 = vmatmul.f32.gmra.mxu0 %v671
    %v946 = vpop.f32.mrf.mxu0
    %v947 = vadd.f32 %v918, %v946
    %948 = vmatmul.f32.gmra.mxu0 %v679
    %v949 = vpop.f32.mrf.mxu0
    %v950 = vadd.f32 %v921, %v949
    %951 = vdwg.mxu0
    %952 = vmatpush.msra.mxu0 %v763
    %953 = vmatpush.msra.mxu0 %v762
    %954 = vmatpush.msra.mxu0 %v761
    %955 = vmatpush.msra.mxu0 %v760
    %956 = vmatpush.msra.mxu0 %v759
    %957 = vmatpush.msra.mxu0 %v758
    %958 = vmatpush.msra.mxu0 %v757
    %959 = vmatpush.msra.mxu0 %v756
    %960 = vmatpush.msra.mxu0 %v755
    %961 = vmatpush.msra.mxu0 %v754
    %962 = vmatpush.msra.mxu0 %v753
    %963 = vmatpush.msra.mxu0 %v752
    %964 = vmatpush.msra.mxu0 %v751
    %965 = vmatpush.msra.mxu0 %v750
    %966 = vmatpush.msra.mxu0 %v749
    %967 = vmatpush.msra.mxu0 %v748
    %968 = vmatmul.f32.gmra.mxu0 %v656
    %v969 = vpop.f32.mrf.mxu0
    %v970 = vadd.f32 %v941, %v969
    %971 = vmatmul.f32.gmra.mxu0 %v664
    %v972 = vpop.f32.mrf.mxu0
    %v973 = vadd.f32 %v944, %v972
    %974 = vmatmul.f32.gmra.mxu0 %v672
    %v975 = vpop.f32.mrf.mxu0
    %v976 = vadd.f32 %v947, %v975
    %977 = vmatmul.f32.gmra.mxu0 %v680
    %v978 = vpop.f32.mrf.mxu0
    %v979 = vadd.f32 %v950, %v978
    %980 = vdwg.mxu0
    %981 = vmatpush.msra.mxu0 %v779
    %982 = vmatpush.msra.mxu0 %v778
    %983 = vmatpush.msra.mxu0 %v777
    %984 = vmatpush.msra.mxu0 %v776
    %985 = vmatpush.msra.mxu0 %v775
    %986 = vmatpush.msra.mxu0 %v774
    %987 = vmatpush.msra.mxu0 %v773
    %988 = vmatpush.msra.mxu0 %v772
    %989 = vmatpush.msra.mxu0 %v771
    %990 = vmatpush.msra.mxu0 %v770
    %991 = vmatpush.msra.mxu0 %v769
    %992 = vmatpush.msra.mxu0 %v768
    %993 = vmatpush.msra.mxu0 %v767
    %994 = vmatpush.msra.mxu0 %v766
    %995 = vmatpush.msra.mxu0 %v765
    %996 = vmatpush.msra.mxu0 %v764
    %997 = vmatmul.f32.gmra.mxu0 %v657
    %v998 = vpop.f32.mrf.mxu0
    %v999 = vadd.f32 %v970, %v998
    %1000 = vmatmul.f32.gmra.mxu0 %v665
    %v1001 = vpop.f32.mrf.mxu0
    %v1002 = vadd.f32 %v973, %v1001
    %1003 = vmatmul.f32.gmra.mxu0 %v673
    %v1004 = vpop.f32.mrf.mxu0
    %v1005 = vadd.f32 %v976, %v1004
    %1006 = vmatmul.f32.gmra.mxu0 %v681
    %v1007 = vpop.f32.mrf.mxu0
    %v1008 = vadd.f32 %v979, %v1007
    %1009 = vdwg.mxu0
    %1010 = vmatpush.msra.mxu0 %v795
    %1011 = vmatpush.msra.mxu0 %v794
    %1012 = vmatpush.msra.mxu0 %v793
    %1013 = vmatpush.msra.mxu0 %v792
    %1014 = vmatpush.msra.mxu0 %v791
    %1015 = vmatpush.msra.mxu0 %v790
    %1016 = vmatpush.msra.mxu0 %v789
    %1017 = vmatpush.msra.mxu0 %v788
    %1018 = vmatpush.msra.mxu0 %v787
    %1019 = vmatpush.msra.mxu0 %v786
    %1020 = vmatpush.msra.mxu0 %v785
    %1021 = vmatpush.msra.mxu0 %v784
    %1022 = vmatpush.msra.mxu0 %v783
    %1023 = vmatpush.msra.mxu0 %v782
    %1024 = vmatpush.msra.mxu0 %v781
    %1025 = vmatpush.msra.mxu0 %v780
    %1026 = vmatmul.f32.gmra.mxu0 %v658
    %v1027 = vpop.f32.mrf.mxu0
    %v1028 = vadd.f32 %v999, %v1027
    %1029 = vmatmul.f32.gmra.mxu0 %v666
    %v1030 = vpop.f32.mrf.mxu0
    %v1031 = vadd.f32 %v1002, %v1030
    %1032 = vmatmul.f32.gmra.mxu0 %v674
    %v1033 = vpop.f32.mrf.mxu0
    %v1034 = vadd.f32 %v1005, %v1033
    %1035 = vmatmul.f32.gmra.mxu0 %v682
    %v1036 = vpop.f32.mrf.mxu0
    %v1037 = vadd.f32 %v1008, %v1036
    %1038 = vdwg.mxu0
    %1039 = vmatpush.msra.mxu0 %v811
    %1040 = vmatpush.msra.mxu0 %v810
    %1041 = vmatpush.msra.mxu0 %v809
    %1042 = vmatpush.msra.mxu0 %v808
    %1043 = vmatpush.msra.mxu0 %v807
    %1044 = vmatpush.msra.mxu0 %v806
    %1045 = vmatpush.msra.mxu0 %v805
    %1046 = vmatpush.msra.mxu0 %v804
    %1047 = vmatpush.msra.mxu0 %v803
    %1048 = vmatpush.msra.mxu0 %v802
    %1049 = vmatpush.msra.mxu0 %v801
    %1050 = vmatpush.msra.mxu0 %v800
    %1051 = vmatpush.msra.mxu0 %v799
    %1052 = vmatpush.msra.mxu0 %v798
    %1053 = vmatpush.msra.mxu0 %v797
    %1054 = vmatpush.msra.mxu0 %v796
    %1055 = vmatmul.f32.gmra.mxu0 %v659
    %v1056 = vpop.f32.mrf.mxu0
    %v1057 = vadd.f32 %v1028, %v1056
    %1058 = vmatmul.f32.gmra.mxu0 %v667
    %v1059 = vpop.f32.mrf.mxu0
    %v1060 = vadd.f32 %v1031, %v1059
    %1061 = vmatmul.f32.gmra.mxu0 %v675
    %v1062 = vpop.f32.mrf.mxu0
    %v1063 = vadd.f32 %v1034, %v1062
    %1064 = vmatmul.f32.gmra.mxu0 %v683
    %v1065 = vpop.f32.mrf.mxu0
    %v1066 = vadd.f32 %v1037, %v1065
    %1067 = vdwg.mxu0
    %v1068 = vmax.f32 %v1057, 0.0
    %v1069 = vmax.f32 %v1060, 0.0
    %v1070 = vmax.f32 %v1063, 0.0
    %v1071 = vmax.f32 %v1066, 0.0
    %v1072 = vld [vmem:[%s6] sm:$0xff]
    %v1073 = vld [vmem:[%s6 + $0x8] sm:$0xff]
    %v1074 = vld [vmem:[%s6 + $0x10] sm:$0xff]
    %v1075 = vld [vmem:[%s6 + $0x18] sm:$0xff]
    %1077 = vset.pattern.permute.xlu0 0
    %1078 = vperm.xlu0 %1077, %v1072
    %v1079 = vpop.permute.xlu0 %1078
    %1082 = vset.pattern.permute.xlu0 0
    %1083 = vperm.xlu0 %1082, %v1073
    %v1084 = vpop.permute.xlu0 %1083
    %1087 = vset.pattern.permute.xlu0 0
    %1088 = vperm.xlu0 %1087, %v1074
    %v1089 = vpop.permute.xlu0 %1088
    %1092 = vset.pattern.permute.xlu0 0
    %1093 = vperm.xlu0 %1092, %v1075
    %v1094 = vpop.permute.xlu0 %1093
    %v1096 = vmul.f32 %v1068, %v1079
    %v1097 = vmul.f32 %v1069, %v1084
    %v1098 = vmul.f32 %v1070, %v1089
    %v1099 = vmul.f32 %v1071, %v1094
    %v1100 = vadd.f32 %v1096, %v1097
    %v1101 = vadd.f32 %v1100, %v1098
    %v1102 = vadd.f32 %v1101, %v1099
    %v1103 = vrot.slane %v1102, 4
    %v1104 = vadd.f32 %v1102, %v1103
    %v1105 = vrot.slane %v1104, 2
    %v1106 = vadd.f32 %v1104, %v1105
    %v1107 = vrot.slane %v1106, 1
    %v1108 = vadd.f32 %v1106, %v1107
    %s1109 = sld [smem:[#allocation3]]
    %v1110 = vstv %s1109
    %v1111 = vadd.f32 %v1108, %v1110
    %1112 = vst [vmem:[%s7] sm:$0x1] %v1111
    // Predicated region
    $region42: #{cnn_model_forward.1} parent=1 // pred_check
      _
    $region43: #{cnn_model_forward.1} parent=1 // pred_check_branch
      %1114 = sbr.rel (0) target = $region45
    $region44: #{cnn_model_forward.1} parent=1 // pred_region
      _
    $region45: #{cnn_model_forward.1} parent=1 // pred_fallthru
      _
    // Predicated region
    $region46: #{cnn_model_forward.1} parent=1 // pred_check
      _
    $region47: #{cnn_model_forward.1} parent=1 // pred_check_branch
      %1116 = sbr.rel (0) target = $region49
    $region48: #{cnn_model_forward.1} parent=1 // pred_region
      _
    $region49: #{cnn_model_forward.1} parent=1 // pred_fallthru
      _
    %1117 = vsyncpa [#allocation5], 1
    %1118 = vsyncpa [#allocation6], 1
    %1119 = vsyncpa [#allocation8], 1

</llo_original>
